<compile_context>
chip_gen: v7x
topology: tpu7x:2x2x1
jax: 0.10.0
libtpu: 0.0.40
codegen_flags: <defaults>
</compile_context>

<pallas_src>
import functools
import math

import numpy as np

import jax
import jax.numpy as jnp
from jax.experimental import pallas as pl
from jax.experimental.pallas import tpu as pltpu


HID = 32                   # synthetic n_hiddens (small)
KT, KH, KW = 2, 4, 4       # kinetics_stride2x4x4 downsample factors
K1 = 3 * KH * KW           # 48: temporal taps folded (frames are copies)
KPAD = 64                  # 48 weight cols + 1 ones/bias col, padded to 64
NPAD = 128                 # lane-dense output slab: [f1 | f2 | 1 | 0]
ONE_COL = 2 * HID          # column carrying the constant 1 (conv2-bias fold)


# ----------------------------------------------------------------------------
# Pallas kernel 1: fused conv1 + conv2 as two bf16 MXU matmuls, f32 accumulate.
#   f1 = x @ w1p               (conv1 bias driven by the ones column of x)
#   f2 = relu(f1) @ w2p        (conv2 bias driven by the propagated ones col)
#   out = f1 + f2  -> [f1 | f2 | 1 | 0]   (single lane-dense 128-wide store)
# ----------------------------------------------------------------------------
def _fused_conv_kernel(x_ref, w1_ref, w2_ref, o_ref):
    f1 = jnp.dot(x_ref[...], w1_ref[...], preferred_element_type=jnp.float32)
    h = jnp.maximum(f1, 0.0).astype(w2_ref.dtype)          # bf16 for the MXU
    f2 = jnp.dot(h, w2_ref[...], preferred_element_type=jnp.float32)
    o_ref[...] = (f1 + f2).astype(o_ref.dtype)             # disjoint col bands


def fused_conv(x_pad, w1p, w2p, *, tm=256):
    """x_pad: (M, KPAD) bf16 -> (M, NPAD) bf16 slab [f1 | f2 | 1 | 0]."""
    M, K = x_pad.shape
    assert K == KPAD and M % tm == 0, (M, K, tm)
    return pl.pallas_call(
        _fused_conv_kernel,
        out_shape=jax.ShapeDtypeStruct((M, NPAD), jnp.bfloat16),
        grid_spec=pltpu.PrefetchScalarGridSpec(
            num_scalar_prefetch=0,
            grid=(M // tm,),                              # 4 steps -> megacore
            in_specs=[
                pl.BlockSpec((tm, KPAD), lambda i: (i, 0)),
                pl.BlockSpec((KPAD, NPAD), lambda i: (0, 0)),
                pl.BlockSpec((NPAD, NPAD), lambda i: (0, 0)),
            ],
            out_specs=pl.BlockSpec((tm, NPAD), lambda i: (i, 0)),
        ),
        compiler_params=pltpu.CompilerParams(
            dimension_semantics=("parallel",)),
    )(x_pad, w1p, w2p)


# ----------------------------------------------------------------------------
# Pallas kernel 2: separable bilinear resize as two bf16 MXU matmuls per
# (image, row-tile):   out[b, tile] = (Rh[tile] @ x[b]) @ Rw^T
# ----------------------------------------------------------------------------
def _bilinear_kernel(rh_ref, rwt_ref, x_ref, o_ref):
    tmp = jnp.dot(rh_ref[...], x_ref[0], preferred_element_type=jnp.float32)
    o_ref[0] = jnp.dot(tmp.astype(rwt_ref.dtype), rwt_ref[...],
                       preferred_element_type=jnp.float32).astype(o_ref.dtype)


def bilinear_resize(x, rh, rwt, *, tile_h=128, out_dtype=jnp.float32):
    """x: (B, IH, IW) bf16; rh: (out_h, IH) bf16; rwt: (IW, out_w) bf16."""
    B, IH, IW = x.shape
    out_h, out_w = rh.shape[0], rwt.shape[1]
    assert rh.shape[1] == IH and rwt.shape[0] == IW
    tile_h = min(tile_h, out_h)
    assert out_h % tile_h == 0
    return pl.pallas_call(
        _bilinear_kernel,
        out_shape=jax.ShapeDtypeStruct((B, out_h, out_w), out_dtype),
        grid_spec=pltpu.PrefetchScalarGridSpec(
            num_scalar_prefetch=0,
            grid=(B, out_h // tile_h),                    # e.g. (2,4)=8 steps
            in_specs=[
                pl.BlockSpec((tile_h, IH), lambda b, i: (i, 0)),
                pl.BlockSpec((IW, out_w), lambda b, i: (0, 0)),   # DMA'd once
                pl.BlockSpec((1, IH, IW), lambda b, i: (b, 0, 0)),
            ],
            out_specs=pl.BlockSpec((1, tile_h, out_w), lambda b, i: (b, i, 0)),
        ),
        compiler_params=pltpu.CompilerParams(
            dimension_semantics=("parallel", "parallel")),
    )(rh, rwt, x)


# ----------------------------------------------------------------------------
# Interpolation matrices (host numpy, lru_cache'd -> jit-time constants).
# ----------------------------------------------------------------------------
@functools.lru_cache(maxsize=None)
def _resize_matrix(out_size, in_size):
    """PyTorch bilinear (align_corners=False) interpolation matrix (out, in)."""
    scale = in_size / out_size
    dst = np.arange(out_size, dtype=np.float64)
    src = (dst + 0.5) * scale - 0.5
    src = np.maximum(src, 0.0)                            # PyTorch clamps neg
    i0 = np.minimum(np.floor(src).astype(np.int64), in_size - 1)
    i1 = np.minimum(i0 + 1, in_size - 1)
    w1 = (src - i0).astype(np.float32)
    w0 = 1.0 - w1
    R = np.zeros((out_size, in_size), np.float32)
    rows = np.arange(out_size)
    np.add.at(R, (rows, i0), w0)
    np.add.at(R, (rows, i1), w1)
    return R


@functools.lru_cache(maxsize=None)
def _resize_matrix_folded(out_size, in_size_full, fold):
    """Resize matrix where groups of `fold` adjacent (equal-valued) input
    columns are summed -> exact resize of the de-duplicated grid."""
    R = _resize_matrix(out_size, in_size_full)
    return R.reshape(out_size, in_size_full // fold, fold).sum(-1)


# ----------------------------------------------------------------------------
# Synthetic encoder parameters (deterministic; stands in for the VQ-VAE).
# ----------------------------------------------------------------------------
def init_params(key):
    k1, k2, k3, k4 = jax.random.split(key, 4)
    fan1 = 3 * KT * KH * KW
    fan2 = HID
    return {
        "conv1_w": jax.random.normal(k1, (HID, 3, KT, KH, KW), jnp.float32)
        / math.sqrt(fan1),
        "conv1_b": jax.random.normal(k2, (HID,), jnp.float32) * 0.01,
        "conv2_w": jax.random.normal(k3, (HID, HID, 1, 1, 1), jnp.float32)
        / math.sqrt(fan2),
        "conv2_b": jax.random.normal(k4, (HID,), jnp.float32) * 0.01,
    }


def _pack_conv_params(params):
    """Pack conv weights into padded lane-dense bf16 operands.

    Folds (exactly, in f32) before the bf16 cast:
      * temporal taps: both kt taps of each patch see the same frame, so
        conv1 weights are summed over kt (K 96 -> 48);
      * the '/255 - 0.5' image preprocess (scale w1, adjust b1);
      * conv1 bias -> extra K row driven by the ones column of the im2col
        matrix; conv2 bias -> extra row driven by a constant-1 column that is
        propagated through the relu.
    """
    w1 = params["conv1_w"].sum(axis=2).reshape(HID, K1).T          # (48, HID)
    w1_s = w1 / 255.0
    b1_f = params["conv1_b"] - 0.5 * jnp.sum(w1, axis=0)
    w2 = params["conv2_w"].reshape(HID, HID).T                     # (HID, HID)

    w1p = jnp.zeros((KPAD, NPAD), jnp.float32)
    w1p = w1p.at[:K1, :HID].set(w1_s)
    w1p = w1p.at[K1, :HID].set(b1_f)       # bias row (x ones column drives it)
    w1p = w1p.at[K1, ONE_COL].set(1.0)     # constant 1 survives relu -> b2

    w2p = jnp.zeros((NPAD, NPAD), jnp.float32)
    w2p = w2p.at[:HID, HID:2 * HID].set(w2)
    w2p = w2p.at[ONE_COL, HID:2 * HID].set(params["conv2_b"])
    return w1p.astype(jnp.bfloat16), w2p.astype(jnp.bfloat16)


# ----------------------------------------------------------------------------
# Grid re-arrangement of reshape_and_interpolate_to_fixed_shape for BOTH
# hooked features at once, straight off the fused-conv output.
# Rows are ordered (h4, w4); cols = [feat0 channels | feat1 channels | ...].
# Channel flat index in the torch reference is hid_idx*T2 + t; the feature is
# t-independent (frames are literal copies) and the resulting duplication of
# adjacent output-grid column pairs is folded into the Rw matrix, so this
# returns the de-duplicated half-width grid (W4*gw/T2 columns).
# ----------------------------------------------------------------------------
def arrange_feature_grids(conv_out, H4, W4, hid, T2, n_feats):
    assert H4 == W4, "grid re-arrangement requires square spatial dims"
    n = hid * T2
    gs = int(math.sqrt(n))
    if gs * gs == n:
        gh, gw = gs, gs
    else:
        gh = 2 ** (int(math.log2(gs)) + 1)
        gw = n // gh
    assert gw % T2 == 0, "layout fusion assumes T2 divides the grid width"
    gbt = gw // T2
    x = conv_out[:, :n_feats * hid].reshape(H4, W4, n_feats, gh, gbt)
    x = jnp.transpose(x, (2, 0, 3, 1, 4))                 # (F, H4, gh, W4, gbt)
    return x.reshape(n_feats, H4 * gh, W4 * gbt)          # (F, H4*gh, W4*gw/T2)


# ----------------------------------------------------------------------------
# Forward pass.
# ----------------------------------------------------------------------------
@jax.jit
def videogpt_ft_forward(images, params):
    """images: (B, 3, H, W) float32, values in [0, 255] (NCHW, like PyTorch)."""
    resolution = 128

    # transforms.Resize((128, 128)) on images[0]  (bilinear, no antialias)
    img = images[0]                                                # (3, H, W)
    _, h_in, w_in = img.shape
    rh_img = jnp.asarray(_resize_matrix(resolution, h_in), jnp.bfloat16)
    rwt_img = jnp.asarray(_resize_matrix(resolution, w_in).T, jnp.bfloat16)
    img128 = bilinear_resize(img.astype(jnp.bfloat16), rh_img, rwt_img,
                             tile_h=128, out_dtype=jnp.bfloat16)   # (3,128,128)

    # preprocess (/255 - 0.5), the 4x temporal repeat and both conv biases are
    # folded into the packed conv weights (see _pack_conv_params).
    T2 = 4 // KT                                                   # 2
    H4, W4 = resolution // KH, resolution // KW                    # 32, 32
    M = H4 * W4                                                    # 1024
    # im2col over non-overlapping 4x4 spatial patches (stride == kernel)
    x = img128.reshape(3, H4, KH, W4, KW)
    x = jnp.transpose(x, (1, 3, 0, 2, 4)).reshape(M, K1)           # (1024, 48)
    x_pad = jnp.concatenate(
        [x, jnp.ones((M, 1), x.dtype), jnp.zeros((M, KPAD - K1 - 1), x.dtype)],
        axis=1)                                                    # (1024, 64)

    w1p, w2p = _pack_conv_params(params)
    conv_out = fused_conv(x_pad, w1p, w2p, tm=256)                 # (1024,128) bf16
    # cols [0:HID]      = f1  (conv1 output,   "hooked" feature 0)
    # cols [HID:2*HID]  = f2  (conv2(relu f1), "hooked" feature 1)

    # --- reshape_and_interpolate_to_fixed_shape + cat ------------------------
    grids = arrange_feature_grids(conv_out, H4, W4, HID, T2, 2)    # (2,256,128)
    full_w = grids.shape[2] * T2                                   # 256
    rh_f = jnp.asarray(_resize_matrix(512, grids.shape[1]), jnp.bfloat16)
    rwt_f = jnp.asarray(_resize_matrix_folded(480, full_w, T2).T, jnp.bfloat16)
    interp = bilinear_resize(grids, rh_f, rwt_f, tile_h=128)       # (2,512,480)
    return interp[:, None]                                         # (2,1,512,480)


if __name__ == "__main__":
    key = jax.random.PRNGKey(0)
    images = jax.random.uniform(key, (2, 3, 32, 32), jnp.float32,
                                minval=0.0, maxval=255.0)
    params = init_params(jax.random.PRNGKey(1))

    out = videogpt_ft_forward(images, params)
    out = jax.block_until_ready(out)

    assert out.shape == (2, 1, 512, 480), out.shape
    assert out.dtype == jnp.float32
    assert bool(jnp.all(jnp.isfinite(out)))
    print("KERNEL_OK")
</pallas_src>

<mosaic_0001>
module attributes {stable_mosaic.version = 11 : i64} {
  func.func @_bilinear_kernel(%arg0: i32, %arg1: i32, %arg2: memref<128x32xbf16, #tpu.memory_space<vmem>>, %arg3: memref<32x128xbf16, #tpu.memory_space<vmem>>, %arg4: memref<1x32x32xbf16, #tpu.memory_space<vmem>>, %arg5: memref<1x128x128xbf16, #tpu.memory_space<vmem>>) attributes {dimension_semantics = [#tpu.dimension_semantics<parallel>, #tpu.dimension_semantics<parallel>], iteration_bounds = array<i64: 3, 1>, scalar_prefetch = 0 : i64, scratch_operands = 0 : i64, tpu.core_type = #tpu.core_type<tc>, window_params = [{transform_indices = @transform_0, window_bounds = array<i64: 128, 32>}, {pipeline_mode = #tpu.pipeline_mode<synchronous>, transform_indices = @transform_1, window_bounds = array<i64: 32, 128>}, {transform_indices = @transform_2, window_bounds = array<i64: 1, 32, 32>}, {transform_indices = @transform_3, window_bounds = array<i64: 1, 128, 128>}]} {
    %c0 = arith.constant 0 : index
    %c0_0 = arith.constant 0 : index
    %0 = vector.load %arg2[%c0, %c0_0] : memref<128x32xbf16, #tpu.memory_space<vmem>>, vector<128x32xbf16>
    %c0_1 = arith.constant 0 : index
    %c0_2 = arith.constant 0 : index
    %c0_3 = arith.constant 0 : index
    %1 = vector.load %arg4[%c0_1, %c0_2, %c0_3] : memref<1x32x32xbf16, #tpu.memory_space<vmem>>, vector<1x32x32xbf16>
    %2 = vector.shape_cast %1 : vector<1x32x32xbf16> to vector<32x32xbf16>
    %cst = arith.constant dense<0.000000e+00> : vector<128x32xf32>
    %3 = tpu.matmul %0, %2, %cst {dimension_numbers = #tpu.dot_dimension_numbers<[1], [0], [0], [1], [0, 0, 1, 1], [], []>} : vector<128x32xbf16>, vector<32x32xbf16>, vector<128x32xf32> -> vector<128x32xf32>
    %4 = arith.truncf %3 : vector<128x32xf32> to vector<128x32xbf16>
    %c0_4 = arith.constant 0 : index
    %c0_5 = arith.constant 0 : index
    %5 = vector.load %arg3[%c0_4, %c0_5] : memref<32x128xbf16, #tpu.memory_space<vmem>>, vector<32x128xbf16>
    %cst_6 = arith.constant dense<0.000000e+00> : vector<128x128xf32>
    %6 = tpu.matmul %4, %5, %cst_6 {dimension_numbers = #tpu.dot_dimension_numbers<[1], [0], [0], [1], [0, 0, 1, 1], [], []>} : vector<128x32xbf16>, vector<32x128xbf16>, vector<128x128xf32> -> vector<128x128xf32>
    %7 = arith.truncf %6 : vector<128x128xf32> to vector<128x128xbf16>
    %c0_7 = arith.constant 0 : index
    %c0_8 = arith.constant 0 : index
    %c0_9 = arith.constant 0 : index
    %8 = vector.load %arg5[%c0_7, %c0_8, %c0_9] : memref<1x128x128xbf16, #tpu.memory_space<vmem>>, vector<1x128x128xbf16>
    %9 = vector.shape_cast %8 : vector<1x128x128xbf16> to vector<128x128xbf16>
    %10 = vector.shape_cast %7 : vector<128x128xbf16> to vector<1x128x128xbf16>
    tpu.vector_store %arg5[%c0_7, %c0_8, %c0_9], %10 {strides = array<i32>} : memref<1x128x128xbf16, #tpu.memory_space<vmem>>, vector<1x128x128xbf16>,
    return
  }
  func.func @transform_0(%arg0: i32, %arg1: i32) -> (i32, i32) {
    %c0_i32 = arith.constant 0 : i32
    %c0_i32_0 = arith.constant 0 : i32
    return %arg1, %c0_i32 : i32, i32
  }
  func.func @transform_1(%arg0: i32, %arg1: i32) -> (i32, i32) {
    %c0_i32 = arith.constant 0 : i32
    %c0_i32_0 = arith.constant 0 : i32
    %c0_i32_1 = arith.constant 0 : i32
    return %c0_i32, %c0_i32_0 : i32, i32
  }
  func.func @transform_2(%arg0: i32, %arg1: i32) -> (i32, i32, i32) {
    %c0_i32 = arith.constant 0 : i32
    %c0_i32_0 = arith.constant 0 : i32
    %c0_i32_1 = arith.constant 0 : i32
    return %arg0, %c0_i32, %c0_i32_0 : i32, i32, i32
  }
  func.func @transform_3(%arg0: i32, %arg1: i32) -> (i32, i32, i32) {
    %c0_i32 = arith.constant 0 : i32
    %c0_i32_0 = arith.constant 0 : i32
    return %arg0, %arg1, %c0_i32 : i32, i32, i32
  }
}

module attributes {stable_mosaic.version = 11 : i64} {
  func.func @_fused_conv_kernel(%arg0: i32, %arg1: memref<256x64xbf16, #tpu.memory_space<vmem>>, %arg2: memref<64x128xbf16, #tpu.memory_space<vmem>>, %arg3: memref<128x128xbf16, #tpu.memory_space<vmem>>, %arg4: memref<256x128xbf16, #tpu.memory_space<vmem>>) attributes {dimension_semantics = [#tpu.dimension_semantics<parallel>], iteration_bounds = array<i64: 4>, scalar_prefetch = 0 : i64, scratch_operands = 0 : i64, tpu.core_type = #tpu.core_type<tc>, window_params = [{transform_indices = @transform_0, window_bounds = array<i64: 256, 64>}, {pipeline_mode = #tpu.pipeline_mode<synchronous>, transform_indices = @transform_1, window_bounds = array<i64: 64, 128>}, {pipeline_mode = #tpu.pipeline_mode<synchronous>, transform_indices = @transform_2, window_bounds = array<i64: 128, 128>}, {transform_indices = @transform_3, window_bounds = array<i64: 256, 128>}]} {
    %c0 = arith.constant 0 : index
    %c0_0 = arith.constant 0 : index
    %0 = vector.load %arg1[%c0, %c0_0] : memref<256x64xbf16, #tpu.memory_space<vmem>>, vector<256x64xbf16>
    %c0_1 = arith.constant 0 : index
    %c0_2 = arith.constant 0 : index
    %1 = vector.load %arg2[%c0_1, %c0_2] : memref<64x128xbf16, #tpu.memory_space<vmem>>, vector<64x128xbf16>
    %cst = arith.constant dense<0.000000e+00> : vector<256x128xf32>
    %2 = tpu.matmul %0, %1, %cst {dimension_numbers = #tpu.dot_dimension_numbers<[1], [0], [0], [1], [0, 0, 1, 1], [], []>} : vector<256x64xbf16>, vector<64x128xbf16>, vector<256x128xf32> -> vector<256x128xf32>
    %cst_3 = arith.constant 0.000000e+00 : f32
    %3 = vector.broadcast %cst_3 : f32 to vector<256x128xf32>
    %4 = arith.maximumf %2, %3 : vector<256x128xf32>
    %5 = arith.truncf %4 : vector<256x128xf32> to vector<256x128xbf16>
    %c0_4 = arith.constant 0 : index
    %c0_5 = arith.constant 0 : index
    %6 = vector.load %arg3[%c0_4, %c0_5] : memref<128x128xbf16, #tpu.memory_space<vmem>>, vector<128x128xbf16>
    %cst_6 = arith.constant dense<0.000000e+00> : vector<256x128xf32>
    %7 = tpu.matmul %5, %6, %cst_6 {dimension_numbers = #tpu.dot_dimension_numbers<[1], [0], [0], [1], [0, 0, 1, 1], [], []>} : vector<256x128xbf16>, vector<128x128xbf16>, vector<256x128xf32> -> vector<256x128xf32>
    %8 = arith.addf %2, %7 : vector<256x128xf32>
    %9 = arith.truncf %8 : vector<256x128xf32> to vector<256x128xbf16>
    %c0_7 = arith.constant 0 : index
    %c0_8 = arith.constant 0 : index
    %10 = vector.load %arg4[%c0_7, %c0_8] : memref<256x128xbf16, #tpu.memory_space<vmem>>, vector<256x128xbf16>
    tpu.vector_store %arg4[%c0_7, %c0_8], %9 {strides = array<i32>} : memref<256x128xbf16, #tpu.memory_space<vmem>>, vector<256x128xbf16>,
    return
  }
  func.func @transform_0(%arg0: i32) -> (i32, i32) {
    %c0_i32 = arith.constant 0 : i32
    %c0_i32_0 = arith.constant 0 : i32
    return %arg0, %c0_i32 : i32, i32
  }
  func.func @transform_1(%arg0: i32) -> (i32, i32) {
    %c0_i32 = arith.constant 0 : i32
    %c0_i32_0 = arith.constant 0 : i32
    %c0_i32_1 = arith.constant 0 : i32
    return %c0_i32, %c0_i32_0 : i32, i32
  }
  func.func @transform_2(%arg0: i32) -> (i32, i32) {
    %c0_i32 = arith.constant 0 : i32
    %c0_i32_0 = arith.constant 0 : i32
    %c0_i32_1 = arith.constant 0 : i32
    return %c0_i32, %c0_i32_0 : i32, i32
  }
  func.func @transform_3(%arg0: i32) -> (i32, i32) {
    %c0_i32 = arith.constant 0 : i32
    %c0_i32_0 = arith.constant 0 : i32
    return %arg0, %c0_i32 : i32, i32
  }
}

module attributes {stable_mosaic.version = 11 : i64} {
  func.func @_bilinear_kernel(%arg0: i32, %arg1: i32, %arg2: memref<128x256xbf16, #tpu.memory_space<vmem>>, %arg3: memref<128x480xbf16, #tpu.memory_space<vmem>>, %arg4: memref<1x256x128xbf16, #tpu.memory_space<vmem>>, %arg5: memref<1x128x480xf32, #tpu.memory_space<vmem>>) attributes {dimension_semantics = [#tpu.dimension_semantics<parallel>, #tpu.dimension_semantics<parallel>], iteration_bounds = array<i64: 2, 4>, scalar_prefetch = 0 : i64, scratch_operands = 0 : i64, tpu.core_type = #tpu.core_type<tc>, window_params = [{transform_indices = @transform_0, window_bounds = array<i64: 128, 256>}, {pipeline_mode = #tpu.pipeline_mode<synchronous>, transform_indices = @transform_1, window_bounds = array<i64: 128, 480>}, {transform_indices = @transform_2, window_bounds = array<i64: 1, 256, 128>}, {transform_indices = @transform_3, window_bounds = array<i64: 1, 128, 480>}]} {
    %c0 = arith.constant 0 : index
    %c0_0 = arith.constant 0 : index
    %0 = vector.load %arg2[%c0, %c0_0] : memref<128x256xbf16, #tpu.memory_space<vmem>>, vector<128x256xbf16>
    %c0_1 = arith.constant 0 : index
    %c0_2 = arith.constant 0 : index
    %c0_3 = arith.constant 0 : index
    %1 = vector.load %arg4[%c0_1, %c0_2, %c0_3] : memref<1x256x128xbf16, #tpu.memory_space<vmem>>, vector<1x256x128xbf16>
    %2 = vector.shape_cast %1 : vector<1x256x128xbf16> to vector<256x128xbf16>
    %cst = arith.constant dense<0.000000e+00> : vector<128x128xf32>
    %3 = tpu.matmul %0, %2, %cst {dimension_numbers = #tpu.dot_dimension_numbers<[1], [0], [0], [1], [0, 0, 1, 1], [], []>} : vector<128x256xbf16>, vector<256x128xbf16>, vector<128x128xf32> -> vector<128x128xf32>
    %4 = arith.truncf %3 : vector<128x128xf32> to vector<128x128xbf16>
    %c0_4 = arith.constant 0 : index
    %c0_5 = arith.constant 0 : index
    %5 = vector.load %arg3[%c0_4, %c0_5] : memref<128x480xbf16, #tpu.memory_space<vmem>>, vector<128x480xbf16>
    %cst_6 = arith.constant dense<0.000000e+00> : vector<128x480xf32>
    %6 = tpu.matmul %4, %5, %cst_6 {dimension_numbers = #tpu.dot_dimension_numbers<[1], [0], [0], [1], [0, 0, 1, 1], [], []>} : vector<128x128xbf16>, vector<128x480xbf16>, vector<128x480xf32> -> vector<128x480xf32>
    %c0_7 = arith.constant 0 : index
    %c0_8 = arith.constant 0 : index
    %c0_9 = arith.constant 0 : index
    %7 = vector.load %arg5[%c0_7, %c0_8, %c0_9] : memref<1x128x480xf32, #tpu.memory_space<vmem>>, vector<1x128x480xf32>
    %8 = vector.shape_cast %7 : vector<1x128x480xf32> to vector<128x480xf32>
    %9 = vector.shape_cast %6 : vector<128x480xf32> to vector<1x128x480xf32>
    tpu.vector_store %arg5[%c0_7, %c0_8, %c0_9], %9 {strides = array<i32>} : memref<1x128x480xf32, #tpu.memory_space<vmem>>, vector<1x128x480xf32>,
    return
  }
  func.func @transform_0(%arg0: i32, %arg1: i32) -> (i32, i32) {
    %c0_i32 = arith.constant 0 : i32
    %c0_i32_0 = arith.constant 0 : i32
    return %arg1, %c0_i32 : i32, i32
  }
  func.func @transform_1(%arg0: i32, %arg1: i32) -> (i32, i32) {
    %c0_i32 = arith.constant 0 : i32
    %c0_i32_0 = arith.constant 0 : i32
    %c0_i32_1 = arith.constant 0 : i32
    return %c0_i32, %c0_i32_0 : i32, i32
  }
  func.func @transform_2(%arg0: i32, %arg1: i32) -> (i32, i32, i32) {
    %c0_i32 = arith.constant 0 : i32
    %c0_i32_0 = arith.constant 0 : i32
    %c0_i32_1 = arith.constant 0 : i32
    return %arg0, %c0_i32, %c0_i32_0 : i32, i32, i32
  }
  func.func @transform_3(%arg0: i32, %arg1: i32) -> (i32, i32, i32) {
    %c0_i32 = arith.constant 0 : i32
    %c0_i32_0 = arith.constant 0 : i32
    return %arg0, %arg1, %c0_i32 : i32, i32, i32
  }
}

</mosaic_0001>

<llo_original>
// kernel: videogpt_ft_forward.3
$region0: #{videogpt_ft_forward.3}
  #allocation0 [shape = 'u32[]', space=smem, size = 0x4, offset = 0x4, fixed_abs, tag = 'smem constant byte address 0x4 - core index']
  #allocation1 [shape = 'u32[144,128]{1,0:T(1,128)}', space=vmem, size = 0x12000, scoped, tag = 'internal scratch']
  %s0 = inlined_call_operand.hbm [shape: bf16[128,32], index: 0, kind: input, shape index: {}]
  %s1 = inlined_call_operand.hbm [shape: bf16[32,128], index: 1, kind: input, shape index: {}]
  %s2 = inlined_call_operand.vmem [shape: bf16[3,32,32], index: 2, kind: input, shape index: {}]
  %s3 = inlined_call_operand.vmem [shape: bf16[3,128,128], index: 3, kind: output, shape index: {}]
  %s4 = sld [smem:[#allocation0]]
  $region53: #{videogpt_ft_forward.3} parent=0
    _
  %s6 = ssub.s32 1, %s4
  %s7 = scalar_select 0, %s6, %s4
  $region1: #{videogpt_ft_forward.3} parent=0
    #allocation2 [shape = 'u8[32768]{0}', space=vmem, size = 0x8000, scoped, tag = 'input window, operand 0, single buffered']
    #allocation3 [shape = 's32[2]{0}', space=sflag, size = 0x8, scoped, tag = 'scoped memory for videogpt_ft_forward.3']
    #allocation4 [shape = 'u8[8192]{0}', space=vmem, size = 0x2000, scoped, tag = 'input window, operand 1, single buffered']
    #allocation5 [shape = 's32[1]{0}', space=sflag, size = 0x4, scoped, tag = 'scoped memory for videogpt_ft_forward.3']
    %8 = vsyncpa [#allocation3], 0
    %9 = vsyncpa [#allocation5], 0
    loop: start=0, step=1, limit=5
    $region2: #{videogpt_ft_forward.3} parent=1 // loop_pre_header
      _
    $region3: #{videogpt_ft_forward.3} parent=1 // loop_header
      %s11 = sphi 0, %s15
      %p12 = scmp.ge.s32.totalorder %s11, 5
      %s18 = sphi 0, %s30
      %s19 = sphi 0, %s26
      %s20 = sphi 0, %s18
      %s21 = sphi 0, %s19
      %s22 = sphi 0, %s20
      %s23 = sphi 0, %s21
      %s33 = sphi 0, %s35
      %s36 = sphi 0, %s33
      %s37 = sphi 0, %s36
      %s53 = sphi 0, %s37
      %s57 = sphi 0, %s57
      %s59 = sphi 0, %s57
      %s60 = sphi 0, %s59
      %s74 = sphi 0, %s60
      %s80 = sphi 0, %s82
      %s83 = sphi 0, %s80
      %s84 = sphi 0, %s83
      %s100 = sphi 0, %s84
      %s108 = sphi 0, %s110
      %s111 = sphi 0, %s108
      %s112 = sphi 0, %s111
      %s128 = sphi 0, %s112
    $region4: #{videogpt_ft_forward.3} parent=1 // loop_header_branch
      %14 = sbr.rel (%p12) target = $region8
    $region5: #{videogpt_ft_forward.3} parent=1 // loop_body
      %s16 = ssub.s32 %s11, 1
      %s17 = ssub.s32 %s11, 2
      %s24 = sadd.s32 1, %s19
      %p25 = scmp.ge.s32.totalorder %s24, 1
      %s26 = scalar_select %p25, 0, %s24
      %s27 = sadd.s32 1, %s18
      %s28 = scalar_select %p25, %s27, %s18
      %p29 = scmp.ge.s32.totalorder %s28, 3
      %s30 = scalar_select %p29, 0, %s28
      %s31 = ssub.s32 %s19, %s26
      %p32 = scmp.eq.s32.totalorder %s31, 0
      %s34 = sadd.s32 %s33, 1
      %s35 = scalar_select %p32, %s33, %s34
      %p38 = pneg %p32
      %p39 = scmp.eq.s32.totalorder %s11, 2
      %p40 = por %p38, %p39
      %p41 = scmp.ne.s32.totalorder %s33, %s36
      %p42 = scmp.eq.s32.totalorder %s11, 0
      %p43 = por %p41, %p42
      %p44 = scmp.ne.s32.totalorder %s33, %s36
      %p45 = scmp.eq.s32.totalorder %s16, 2
      %p46 = por %p44, %p45
      %p47 = scmp.ne.s32.totalorder %s36, %s37
      %p48 = scmp.eq.s32.totalorder %s16, 0
      %p49 = por %p47, %p48
      %p50 = scmp.ne.s32.totalorder %s36, %s37
      %p51 = scmp.eq.s32.totalorder %s17, 2
      %p52 = por %p50, %p51
      %p54 = scmp.ne.s32.totalorder %s37, %s53
      %p55 = scmp.eq.s32.totalorder %s17, 0
      %p56 = por %p54, %p55
      %s58 = sadd.s32 %s57, 1
      %p61 = scmp.eq.s32.totalorder %s11, 2
      %p62 = scmp.ne.s32.totalorder %s57, %s59
      %p63 = scmp.eq.s32.totalorder %s11, 0
      %p64 = por %p62, %p63
      %p65 = scmp.ne.s32.totalorder %s57, %s59
      %p66 = scmp.eq.s32.totalorder %s16, 2
      %p67 = por %p65, %p66
      %p68 = scmp.ne.s32.totalorder %s59, %s60
      %p69 = scmp.eq.s32.totalorder %s16, 0
      %p70 = por %p68, %p69
      %p71 = scmp.ne.s32.totalorder %s59, %s60
      %p72 = scmp.eq.s32.totalorder %s17, 2
      %p73 = por %p71, %p72
      %p75 = scmp.ne.s32.totalorder %s60, %s74
      %p76 = scmp.eq.s32.totalorder %s17, 0
      %p77 = por %p75, %p76
      %s78 = ssub.s32 %s18, %s30
      %p79 = scmp.eq.s32.totalorder %s78, 0
      %s81 = sadd.s32 %s80, 1
      %s82 = scalar_select %p79, %s80, %s81
      %p85 = pneg %p79
      %p86 = scmp.eq.s32.totalorder %s11, 2
      %p87 = por %p85, %p86
      %p88 = scmp.ne.s32.totalorder %s80, %s83
      %p89 = scmp.eq.s32.totalorder %s11, 0
      %p90 = por %p88, %p89
      %p91 = scmp.ne.s32.totalorder %s80, %s83
      %p92 = scmp.eq.s32.totalorder %s16, 2
      %p93 = por %p91, %p92
      %p94 = scmp.ne.s32.totalorder %s83, %s84
      %p95 = scmp.eq.s32.totalorder %s16, 0
      %p96 = por %p94, %p95
      %p97 = scmp.ne.s32.totalorder %s83, %s84
      %p98 = scmp.eq.s32.totalorder %s17, 2
      %p99 = por %p97, %p98
      %p101 = scmp.ne.s32.totalorder %s84, %s100
      %p102 = scmp.eq.s32.totalorder %s17, 0
      %p103 = por %p101, %p102
      %s104 = ssub.s32 %s18, %s30
      %s105 = ssub.s32 %s19, %s26
      %s106 = sor.u32 %s104, %s105
      %p107 = scmp.eq.s32.totalorder %s106, 0
      %s109 = sadd.s32 %s108, 1
      %s110 = scalar_select %p107, %s108, %s109
      %p113 = pneg %p107
      %p114 = scmp.eq.s32.totalorder %s11, 2
      %p115 = por %p113, %p114
      %p116 = scmp.ne.s32.totalorder %s108, %s111
      %p117 = scmp.eq.s32.totalorder %s11, 0
      %p118 = por %p116, %p117
      %p119 = scmp.ne.s32.totalorder %s108, %s111
      %p120 = scmp.eq.s32.totalorder %s16, 2
      %p121 = por %p119, %p120
      %p122 = scmp.ne.s32.totalorder %s111, %s112
      %p123 = scmp.eq.s32.totalorder %s16, 0
      %p124 = por %p122, %p123
      %p125 = scmp.ne.s32.totalorder %s111, %s112
      %p126 = scmp.eq.s32.totalorder %s17, 2
      %p127 = por %p125, %p126
      %p129 = scmp.ne.s32.totalorder %s112, %s128
      %p130 = scmp.eq.s32.totalorder %s17, 0
      %p131 = por %p129, %p130
      %p132 = scmp.le.s32.totalorder 1, %s11
      %p133 = scmp.lt.s32.totalorder %s11, 4
      %p134 = pnand %p132, %p133
      %p135 = pneg %p134
      // Predicated region
      $region9: #{videogpt_ft_forward.3} parent=5 // pred_check
        _
      $region10: #{videogpt_ft_forward.3} parent=5 // pred_check_branch
        %137 = sbr.rel (%p134) target = $region12
      $region11: #{videogpt_ft_forward.3} parent=5 // pred_region
        %s138 = ssub.s32 %s11, 1
        // Predicated region
        $region13: #{videogpt_ft_forward.3} parent=11 // pred_check
          %p139 = pneg %p49
        $region14: #{videogpt_ft_forward.3} parent=11 // pred_check_branch
          %141 = sbr.rel (%p139) target = $region16
        $region15: #{videogpt_ft_forward.3} parent=11 // pred_region
          %s142 = smul.u32 16, %s21
          %s144 = ssub.s32 1024, 1024
          %145 = vsyncadd [#allocation3], %s144
          %s146 = smul.addr %s142, 64
          %s147 = scalar_lea.hbm %s0, %s146
          %s148 = sshll.u32 [#allocation2], 4
          %s149 = int_to_ptr.vmem [resolvable:$true] %s148
          %154 = dma.hbm_to_vmem [thread:$0]  %s147, 1024, %s149, [#allocation3], 64, 64, 4
        $region16: #{videogpt_ft_forward.3} parent=11 // pred_fallthru
          _
        // Predicated region
        $region17: #{videogpt_ft_forward.3} parent=11 // pred_check
          %p155 = pneg %p70
        $region18: #{videogpt_ft_forward.3} parent=11 // pred_check_branch
          %157 = sbr.rel (%p155) target = $region20
        $region19: #{videogpt_ft_forward.3} parent=11 // pred_region
          %s159 = ssub.s32 256, 256
          %160 = vsyncadd [#allocation5], %s159
          %s161 = sshll.u32 [#allocation4], 4
          %s162 = int_to_ptr.vmem [resolvable:$true] %s161
          %167 = dma.hbm_to_vmem [thread:$0]  %s1, 256, %s162, [#allocation5], 64, 64, 4
        $region20: #{videogpt_ft_forward.3} parent=11 // pred_fallthru
          _
      $region12: #{videogpt_ft_forward.3} parent=5 // pred_fallthru
        _
      %p168 = scmp.lt.s32.totalorder %s11, 3
      // Predicated region
      $region21: #{videogpt_ft_forward.3} parent=5 // pred_check
        %p169 = pneg %p168
      $region22: #{videogpt_ft_forward.3} parent=5 // pred_check_branch
        %171 = sbr.rel (%p169) target = $region24
      $region23: #{videogpt_ft_forward.3} parent=5 // pred_region
        // Predicated region
        $region25: #{videogpt_ft_forward.3} parent=23 // pred_check
          %p172 = pneg %p90
        $region26: #{videogpt_ft_forward.3} parent=23 // pred_check_branch
          %174 = sbr.rel (%p172) target = $region28
        $region27: #{videogpt_ft_forward.3} parent=23 // pred_region
          %p175 = scmp.lt.s32.totalorder %s18, 2
          %s176 = scalar_select %p175, %s18, 2
          %s177 = smul.addr %s176, 4
          %s178 = smul.addr %s177, 4
          %s179 = scalar_lea.vmem %s2, %s178
        $region28: #{videogpt_ft_forward.3} parent=23 // pred_fallthru
          _
      $region24: #{videogpt_ft_forward.3} parent=5 // pred_fallthru
        _
      %p180 = scmp.le.s32.totalorder 1, %s11
      %p181 = scmp.lt.s32.totalorder %s11, 4
      %p182 = pnand %p180, %p181
      %p183 = pneg %p182
      // Predicated region
      $region29: #{videogpt_ft_forward.3} parent=5 // pred_check
        _
      $region30: #{videogpt_ft_forward.3} parent=5 // pred_check_branch
        %185 = sbr.rel (%p182) target = $region32
      $region31: #{videogpt_ft_forward.3} parent=5 // pred_region
        %s186 = ssub.s32 %s11, 1
        // Predicated region
        $region33: #{videogpt_ft_forward.3} parent=31 // pred_check
          %p187 = pneg %p49
        $region34: #{videogpt_ft_forward.3} parent=31 // pred_check_branch
          %189 = sbr.rel (%p187) target = $region36
        $region35: #{videogpt_ft_forward.3} parent=31 // pred_region
          %190 = dma.done [#allocation3], 1024
        $region36: #{videogpt_ft_forward.3} parent=31 // pred_fallthru
          _
        // Predicated region
        $region37: #{videogpt_ft_forward.3} parent=31 // pred_check
          %p191 = pneg %p70
        $region38: #{videogpt_ft_forward.3} parent=31 // pred_check_branch
          %193 = sbr.rel (%p191) target = $region40
        $region39: #{videogpt_ft_forward.3} parent=31 // pred_region
          %194 = dma.done [#allocation5], 256
        $region40: #{videogpt_ft_forward.3} parent=31 // pred_fallthru
          _
        %p195 = pneg %p49
        %p196 = pneg %p46
        %p197 = pneg %p70
        %p198 = pneg %p67
        %p199 = scmp.lt.s32.totalorder %s20, 2
        %s200 = scalar_select %p199, %s20, 2
        %s201 = smul.addr %s200, 4
        %s202 = smul.addr %s201, 4
        %s203 = scalar_lea.vmem %s2, %s202
        %p204 = pneg %p96
        %p205 = pneg %p93
        %p206 = pneg %p124
        %p207 = pneg %p121
        %s208 = smul.u32 16, %s21
        %p209 = scmp.lt.s32.totalorder %s20, 2
        %s210 = scalar_select %p209, %s20, 2
        %p211 = scmp.lt.s32.totalorder %s208, 15
        %s212 = scalar_select %p211, %s208, 15
        %s213 = smul.addr %s210, 16
        %s214 = sadd.s32 %s212, %s213
        %s215 = smul.addr %s214, 4
        %s216 = scalar_lea.vmem %s3, %s215
        %s217 = smul.u32 16, %s21
        %p218 = scmp.lt.s32.totalorder %s20, 2
        %s219 = scalar_select %p218, %s20, 2
        %s220 = smul.addr %s219, 4
        %s221 = smul.addr %s220, 4
        %s222 = scalar_lea.vmem %s2, %s221
        %s223 = smul.u32 16, %s21
        %p224 = scmp.lt.s32.totalorder %s20, 2
        %s225 = scalar_select %p224, %s20, 2
        %p226 = scmp.lt.s32.totalorder %s223, 15
        %s227 = scalar_select %p226, %s223, 15
        %s228 = smul.addr %s225, 16
        %s229 = sadd.s32 %s227, %s228
        %s230 = smul.addr %s229, 4
        %s231 = scalar_lea.vmem %s3, %s230
        %s232 = smul.u32 16, %s21
        %v234 = vld [vmem:[#allocation2] sm:$0xf]
        %v235 = vld [vmem:[#allocation2 + $0x4] sm:$0xf]
        %v236 = vld [vmem:[#allocation2 + $0x8] sm:$0xf]
        %v237 = vld [vmem:[#allocation2 + $0xc] sm:$0xf]
        %v238 = vld [vmem:[#allocation2 + $0x10] sm:$0xf]
        %v239 = vld [vmem:[#allocation2 + $0x14] sm:$0xf]
        %v240 = vld [vmem:[#allocation2 + $0x18] sm:$0xf]
        %v241 = vld [vmem:[#allocation2 + $0x1c] sm:$0xf]
        %v242 = vld [vmem:[#allocation2 + $0x20] sm:$0xf]
        %v243 = vld [vmem:[#allocation2 + $0x24] sm:$0xf]
        %v244 = vld [vmem:[#allocation2 + $0x28] sm:$0xf]
        %v245 = vld [vmem:[#allocation2 + $0x2c] sm:$0xf]
        %v246 = vld [vmem:[#allocation2 + $0x30] sm:$0xf]
        %v247 = vld [vmem:[#allocation2 + $0x34] sm:$0xf]
        %v248 = vld [vmem:[#allocation2 + $0x38] sm:$0xf]
        %v249 = vld [vmem:[#allocation2 + $0x3c] sm:$0xf]
        %v250 = vld [vmem:[%s222] sm:$0xf]
        %v251 = vld [vmem:[%s222 + $0x4] sm:$0xf]
        %v252 = vld [vmem:[%s222 + $0x8] sm:$0xf]
        %v253 = vld [vmem:[%s222 + $0xc] sm:$0xf]
        %v270 = vunpack.c.l.b16 %v234
        %v271 = vunpack.c.l.b16 %v235
        %v272 = vunpack.c.l.b16 %v236
        %v273 = vunpack.c.l.b16 %v237
        %v274 = vunpack.c.l.b16 %v238
        %v275 = vunpack.c.l.b16 %v239
        %v276 = vunpack.c.l.b16 %v240
        %v277 = vunpack.c.l.b16 %v241
        %v278 = vunpack.c.l.b16 %v242
        %v279 = vunpack.c.l.b16 %v243
        %v280 = vunpack.c.l.b16 %v244
        %v281 = vunpack.c.l.b16 %v245
        %v282 = vunpack.c.l.b16 %v246
        %v283 = vunpack.c.l.b16 %v247
        %v284 = vunpack.c.l.b16 %v248
        %v285 = vunpack.c.l.b16 %v249
        %v286 = vpack.c.b16 %v271, %v270
        %v287 = vpack.c.b16 %v273, %v272
        %v288 = vpack.c.b16 %v275, %v274
        %v289 = vpack.c.b16 %v277, %v276
        %v290 = vpack.c.b16 %v279, %v278
        %v291 = vpack.c.b16 %v281, %v280
        %v292 = vpack.c.b16 %v283, %v282
        %v293 = vpack.c.b16 %v285, %v284
        %v298 = vunpack.c.l.b16 %v250
        %v299 = vunpack.c.l.b16 %v251
        %v300 = vunpack.c.l.b16 %v252
        %v301 = vunpack.c.l.b16 %v253
        %v302 = vpack.c.b16 %v299, %v298
        %v303 = vpack.c.b16 %v301, %v300
        %vm306 = vcmask 261120
        %v308 = vsel %vm306, %v286, 0
        %v311 = vsel %vm306, %v287, 0
        %v314 = vsel %vm306, %v288, 0
        %v317 = vsel %vm306, %v289, 0
        %v320 = vsel %vm306, %v290, 0
        %v323 = vsel %vm306, %v291, 0
        %v326 = vsel %vm306, %v292, 0
        %v329 = vsel %vm306, %v293, 0
        %331 = vmatprep.subr.bf16.mxu0 0
        %332 = vmatpush1.bf16.msra.mxu0 %v302
        %333 = vmatprep.subr.bf16.mxu0 0
        %334 = vmatpush1.bf16.msra.mxu0 %v303
        %335 = vmatprep.subr.bf16.mxu0 0
        %336 = vmatpush1.bf16.msra.mxu0 0
        %337 = vmatprep.subr.bf16.mxu0 0
        %338 = vmatpush1.bf16.msra.mxu0 0
        %339 = vmatprep.subr.bf16.mxu0 0
        %340 = vmatpush1.bf16.msra.mxu0 0
        %341 = vmatprep.subr.bf16.mxu0 0
        %342 = vmatpush1.bf16.msra.mxu0 0
        %343 = vmatprep.subr.bf16.mxu0 0
        %344 = vmatpush1.bf16.msra.mxu0 0
        %345 = vmatprep.subr.bf16.mxu0 0
        %346 = vmatpush1.bf16.msra.mxu0 0
        %347 = vmatprep.subr.bf16.mxu0 0
        %348 = vmatpush1.bf16.msra.mxu0 0
        %349 = vmatprep.subr.bf16.mxu0 0
        %350 = vmatpush1.bf16.msra.mxu0 0
        %351 = vmatprep.subr.bf16.mxu0 0
        %352 = vmatpush1.bf16.msra.mxu0 0
        %353 = vmatprep.subr.bf16.mxu0 0
        %354 = vmatpush1.bf16.msra.mxu0 0
        %355 = vmatprep.subr.bf16.mxu0 0
        %356 = vmatpush1.bf16.msra.mxu0 0
        %357 = vmatprep.subr.bf16.mxu0 0
        %358 = vmatpush1.bf16.msra.mxu0 0
        %359 = vmatprep.subr.bf16.mxu0 0
        %360 = vmatpush1.bf16.msra.mxu0 0
        %361 = vmatprep.subr.bf16.mxu0 0
        %362 = vmatpush1.bf16.msra.mxu0 0
        %363 = vmatprep.mubr.bf16.mxu0 0
        %364 = vmatmul.mubr.bf16.gmra.mrb[0].mxu0 %v308
        %v365 = vpop.f32.mrb[0].mxu0
        %v366 = vadd.f32 0.0, %v365
        %v367 = vpop.f32.mrb[0].mxu0
        %v368 = vpop.f32.mrb[0].mxu0
        %v369 = vadd.f32 0.0, %v368
        %v370 = vpop.f32.mrb[0].mxu0
        %371 = vmatprep.mubr.bf16.mxu0 0
        %372 = vmatmul.mubr.bf16.gmra.mrb[0].mxu0 %v311
        %v373 = vpop.f32.mrb[0].mxu0
        %v374 = vadd.f32 0.0, %v373
        %v375 = vpop.f32.mrb[0].mxu0
        %v376 = vpop.f32.mrb[0].mxu0
        %v377 = vadd.f32 0.0, %v376
        %v378 = vpop.f32.mrb[0].mxu0
        %379 = vmatprep.mubr.bf16.mxu0 0
        %380 = vmatmul.mubr.bf16.gmra.mrb[0].mxu0 %v314
        %v381 = vpop.f32.mrb[0].mxu0
        %v382 = vadd.f32 0.0, %v381
        %v383 = vpop.f32.mrb[0].mxu0
        %v384 = vpop.f32.mrb[0].mxu0
        %v385 = vadd.f32 0.0, %v384
        %v386 = vpop.f32.mrb[0].mxu0
        %387 = vmatprep.mubr.bf16.mxu0 0
        %388 = vmatmul.mubr.bf16.gmra.mrb[0].mxu0 %v317
        %v389 = vpop.f32.mrb[0].mxu0
        %v390 = vadd.f32 0.0, %v389
        %v391 = vpop.f32.mrb[0].mxu0
        %v392 = vpop.f32.mrb[0].mxu0
        %v393 = vadd.f32 0.0, %v392
        %v394 = vpop.f32.mrb[0].mxu0
        %395 = vmatprep.mubr.bf16.mxu0 0
        %396 = vmatmul.mubr.bf16.gmra.mrb[0].mxu0 %v320
        %v397 = vpop.f32.mrb[0].mxu0
        %v398 = vadd.f32 0.0, %v397
        %v399 = vpop.f32.mrb[0].mxu0
        %v400 = vpop.f32.mrb[0].mxu0
        %v401 = vadd.f32 0.0, %v400
        %v402 = vpop.f32.mrb[0].mxu0
        %403 = vmatprep.mubr.bf16.mxu0 0
        %404 = vmatmul.mubr.bf16.gmra.mrb[0].mxu0 %v323
        %v405 = vpop.f32.mrb[0].mxu0
        %v406 = vadd.f32 0.0, %v405
        %v407 = vpop.f32.mrb[0].mxu0
        %v408 = vpop.f32.mrb[0].mxu0
        %v409 = vadd.f32 0.0, %v408
        %v410 = vpop.f32.mrb[0].mxu0
        %411 = vmatprep.mubr.bf16.mxu0 0
        %412 = vmatmul.mubr.bf16.gmra.mrb[0].mxu0 %v326
        %v413 = vpop.f32.mrb[0].mxu0
        %v414 = vadd.f32 0.0, %v413
        %v415 = vpop.f32.mrb[0].mxu0
        %v416 = vpop.f32.mrb[0].mxu0
        %v417 = vadd.f32 0.0, %v416
        %v418 = vpop.f32.mrb[0].mxu0
        %419 = vmatprep.mubr.bf16.mxu0 0
        %420 = vmatmul.mubr.bf16.gmra.mrb[0].mxu0 %v329
        %v421 = vpop.f32.mrb[0].mxu0
        %v422 = vadd.f32 0.0, %v421
        %v423 = vpop.f32.mrb[0].mxu0
        %v424 = vpop.f32.mrb[0].mxu0
        %v425 = vadd.f32 0.0, %v424
        %v426 = vpop.f32.mrb[0].mxu0
        %427 = vdwg.mxu0
        %v428 = vpack.c.bf16 %v369, %v366
        %v429 = vpack.c.bf16 %v377, %v374
        %v430 = vpack.c.bf16 %v385, %v382
        %v431 = vpack.c.bf16 %v393, %v390
        %v432 = vpack.c.bf16 %v401, %v398
        %v433 = vpack.c.bf16 %v409, %v406
        %v434 = vpack.c.bf16 %v417, %v414
        %v435 = vpack.c.bf16 %v425, %v422
        %v436 = vld [vmem:[#allocation4] sm:$0xf]
        %v437 = vld [vmem:[#allocation4 + $0x4] sm:$0xf]
        %v438 = vld [vmem:[#allocation4 + $0x8] sm:$0xf]
        %v439 = vld [vmem:[#allocation4 + $0xc] sm:$0xf]
        %v444 = vunpack.c.l.b16 %v436
        %v445 = vunpack.c.l.b16 %v437
        %v446 = vunpack.c.l.b16 %v438
        %v447 = vunpack.c.l.b16 %v439
        %v448 = vpack.c.b16 %v445, %v444
        %v449 = vpack.c.b16 %v447, %v446
        %v453 = vsel %vm306, %v428, 0
        %v456 = vsel %vm306, %v429, 0
        %v459 = vsel %vm306, %v430, 0
        %v462 = vsel %vm306, %v431, 0
        %v465 = vsel %vm306, %v432, 0
        %v468 = vsel %vm306, %v433, 0
        %v471 = vsel %vm306, %v434, 0
        %v474 = vsel %vm306, %v435, 0
        %476 = vmatprep.subr.bf16.mxu0 0
        %477 = vmatpush1.bf16.msra.mxu0 %v448
        %478 = vmatprep.subr.bf16.mxu0 0
        %479 = vmatpush1.bf16.msra.mxu0 %v449
        %480 = vmatprep.subr.bf16.mxu0 0
        %481 = vmatpush1.bf16.msra.mxu0 0
        %482 = vmatprep.subr.bf16.mxu0 0
        %483 = vmatpush1.bf16.msra.mxu0 0
        %484 = vmatprep.subr.bf16.mxu0 0
        %485 = vmatpush1.bf16.msra.mxu0 0
        %486 = vmatprep.subr.bf16.mxu0 0
        %487 = vmatpush1.bf16.msra.mxu0 0
        %488 = vmatprep.subr.bf16.mxu0 0
        %489 = vmatpush1.bf16.msra.mxu0 0
        %490 = vmatprep.subr.bf16.mxu0 0
        %491 = vmatpush1.bf16.msra.mxu0 0
        %492 = vmatprep.subr.bf16.mxu0 0
        %493 = vmatpush1.bf16.msra.mxu0 0
        %494 = vmatprep.subr.bf16.mxu0 0
        %495 = vmatpush1.bf16.msra.mxu0 0
        %496 = vmatprep.subr.bf16.mxu0 0
        %497 = vmatpush1.bf16.msra.mxu0 0
        %498 = vmatprep.subr.bf16.mxu0 0
        %499 = vmatpush1.bf16.msra.mxu0 0
        %500 = vmatprep.subr.bf16.mxu0 0
        %501 = vmatpush1.bf16.msra.mxu0 0
        %502 = vmatprep.subr.bf16.mxu0 0
        %503 = vmatpush1.bf16.msra.mxu0 0
        %504 = vmatprep.subr.bf16.mxu0 0
        %505 = vmatpush1.bf16.msra.mxu0 0
        %506 = vmatprep.subr.bf16.mxu0 0
        %507 = vmatpush1.bf16.msra.mxu0 0
        %508 = vmatprep.mubr.bf16.mxu0 0
        %509 = vmatmul.mubr.bf16.gmra.mrb[0].mxu0 %v453
        %v510 = vpop.f32.mrb[0].mxu0
        %v511 = vadd.f32 0.0, %v510
        %v512 = vpop.f32.mrb[0].mxu0
        %v513 = vpop.f32.mrb[0].mxu0
        %v514 = vadd.f32 0.0, %v513
        %v515 = vpop.f32.mrb[0].mxu0
        %516 = vmatprep.mubr.bf16.mxu0 0
        %517 = vmatmul.mubr.bf16.gmra.mrb[0].mxu0 %v456
        %v518 = vpop.f32.mrb[0].mxu0
        %v519 = vadd.f32 0.0, %v518
        %v520 = vpop.f32.mrb[0].mxu0
        %v521 = vpop.f32.mrb[0].mxu0
        %v522 = vadd.f32 0.0, %v521
        %v523 = vpop.f32.mrb[0].mxu0
        %524 = vmatprep.mubr.bf16.mxu0 0
        %525 = vmatmul.mubr.bf16.gmra.mrb[0].mxu0 %v459
        %v526 = vpop.f32.mrb[0].mxu0
        %v527 = vadd.f32 0.0, %v526
        %v528 = vpop.f32.mrb[0].mxu0
        %v529 = vpop.f32.mrb[0].mxu0
        %v530 = vadd.f32 0.0, %v529
        %v531 = vpop.f32.mrb[0].mxu0
        %532 = vmatprep.mubr.bf16.mxu0 0
        %533 = vmatmul.mubr.bf16.gmra.mrb[0].mxu0 %v462
        %v534 = vpop.f32.mrb[0].mxu0
        %v535 = vadd.f32 0.0, %v534
        %v536 = vpop.f32.mrb[0].mxu0
        %v537 = vpop.f32.mrb[0].mxu0
        %v538 = vadd.f32 0.0, %v537
        %v539 = vpop.f32.mrb[0].mxu0
        %540 = vmatprep.mubr.bf16.mxu0 0
        %541 = vmatmul.mubr.bf16.gmra.mrb[0].mxu0 %v465
        %v542 = vpop.f32.mrb[0].mxu0
        %v543 = vadd.f32 0.0, %v542
        %v544 = vpop.f32.mrb[0].mxu0
        %v545 = vpop.f32.mrb[0].mxu0
        %v546 = vadd.f32 0.0, %v545
        %v547 = vpop.f32.mrb[0].mxu0
        %548 = vmatprep.mubr.bf16.mxu0 0
        %549 = vmatmul.mubr.bf16.gmra.mrb[0].mxu0 %v468
        %v550 = vpop.f32.mrb[0].mxu0
        %v551 = vadd.f32 0.0, %v550
        %v552 = vpop.f32.mrb[0].mxu0
        %v553 = vpop.f32.mrb[0].mxu0
        %v554 = vadd.f32 0.0, %v553
        %v555 = vpop.f32.mrb[0].mxu0
        %556 = vmatprep.mubr.bf16.mxu0 0
        %557 = vmatmul.mubr.bf16.gmra.mrb[0].mxu0 %v471
        %v558 = vpop.f32.mrb[0].mxu0
        %v559 = vadd.f32 0.0, %v558
        %v560 = vpop.f32.mrb[0].mxu0
        %v561 = vpop.f32.mrb[0].mxu0
        %v562 = vadd.f32 0.0, %v561
        %v563 = vpop.f32.mrb[0].mxu0
        %564 = vmatprep.mubr.bf16.mxu0 0
        %565 = vmatmul.mubr.bf16.gmra.mrb[0].mxu0 %v474
        %v566 = vpop.f32.mrb[0].mxu0
        %v567 = vadd.f32 0.0, %v566
        %v568 = vpop.f32.mrb[0].mxu0
        %v569 = vpop.f32.mrb[0].mxu0
        %v570 = vadd.f32 0.0, %v569
        %v571 = vpop.f32.mrb[0].mxu0
        %572 = vdwg.mxu0
        %v573 = vpack.c.bf16 %v514, %v511
        %v574 = vpack.c.bf16 %v522, %v519
        %v575 = vpack.c.bf16 %v530, %v527
        %v576 = vpack.c.bf16 %v538, %v535
        %v577 = vpack.c.bf16 %v546, %v543
        %v578 = vpack.c.bf16 %v554, %v551
        %v579 = vpack.c.bf16 %v562, %v559
        %v580 = vpack.c.bf16 %v570, %v567
        %v589 = vunpack.c.l.b16 %v573
        %v590 = vunpack.c.h.b16 %v573
        %v591 = vunpack.c.l.b16 %v574
        %v592 = vunpack.c.h.b16 %v574
        %v593 = vunpack.c.l.b16 %v575
        %v594 = vunpack.c.h.b16 %v575
        %v595 = vunpack.c.l.b16 %v576
        %v596 = vunpack.c.h.b16 %v576
        %v597 = vunpack.c.l.b16 %v577
        %v598 = vunpack.c.h.b16 %v577
        %v599 = vunpack.c.l.b16 %v578
        %v600 = vunpack.c.h.b16 %v578
        %v601 = vunpack.c.l.b16 %v579
        %v602 = vunpack.c.h.b16 %v579
        %v603 = vunpack.c.l.b16 %v580
        %v604 = vunpack.c.h.b16 %v580
        %v605 = vpack.c.b16 %v589, %v589
        %v606 = vpack.c.b16 %v590, %v590
        %v607 = vpack.c.b16 %v591, %v591
        %v608 = vpack.c.b16 %v592, %v592
        %v609 = vpack.c.b16 %v593, %v593
        %v610 = vpack.c.b16 %v594, %v594
        %v611 = vpack.c.b16 %v595, %v595
        %v612 = vpack.c.b16 %v596, %v596
        %v613 = vpack.c.b16 %v597, %v597
        %v614 = vpack.c.b16 %v598, %v598
        %v615 = vpack.c.b16 %v599, %v599
        %v616 = vpack.c.b16 %v600, %v600
        %v617 = vpack.c.b16 %v601, %v601
        %v618 = vpack.c.b16 %v602, %v602
        %v619 = vpack.c.b16 %v603, %v603
        %v620 = vpack.c.b16 %v604, %v604
        %637 = vst [vmem:[%s231] sm:$0xf] %v605
        %638 = vst [vmem:[%s231 + $0x4] sm:$0xf] %v606
        %639 = vst [vmem:[%s231 + $0x8] sm:$0xf] %v607
        %640 = vst [vmem:[%s231 + $0xc] sm:$0xf] %v608
        %641 = vst [vmem:[%s231 + $0x10] sm:$0xf] %v609
        %642 = vst [vmem:[%s231 + $0x14] sm:$0xf] %v610
        %643 = vst [vmem:[%s231 + $0x18] sm:$0xf] %v611
        %644 = vst [vmem:[%s231 + $0x1c] sm:$0xf] %v612
        %645 = vst [vmem:[%s231 + $0x20] sm:$0xf] %v613
        %646 = vst [vmem:[%s231 + $0x24] sm:$0xf] %v614
        %647 = vst [vmem:[%s231 + $0x28] sm:$0xf] %v615
        %648 = vst [vmem:[%s231 + $0x2c] sm:$0xf] %v616
        %649 = vst [vmem:[%s231 + $0x30] sm:$0xf] %v617
        %650 = vst [vmem:[%s231 + $0x34] sm:$0xf] %v618
        %651 = vst [vmem:[%s231 + $0x38] sm:$0xf] %v619
        %652 = vst [vmem:[%s231 + $0x3c] sm:$0xf] %v620
        %s653 = smul.u32 16, %s21
        %p654 = scmp.lt.s32.totalorder %s20, 2
        %s655 = scalar_select %p654, %s20, 2
        %p656 = scmp.lt.s32.totalorder %s653, 15
        %s657 = scalar_select %p656, %s653, 15
        %s658 = smul.addr %s655, 16
        %s659 = sadd.s32 %s657, %s658
        %s660 = smul.addr %s659, 4
        %s661 = scalar_lea.vmem %s3, %s660
        // Predicated region
        $region41: #{videogpt_ft_forward.3} parent=31 // pred_check
          %p662 = pneg %p121
        $region42: #{videogpt_ft_forward.3} parent=31 // pred_check_branch
          %664 = sbr.rel (%p662) target = $region44
        $region43: #{videogpt_ft_forward.3} parent=31 // pred_region
          %s665 = smul.u32 16, %s21
        $region44: #{videogpt_ft_forward.3} parent=31 // pred_fallthru
          _
      $region32: #{videogpt_ft_forward.3} parent=5 // pred_fallthru
        _
      %p666 = scmp.le.s32.totalorder 2, %s11
      // Predicated region
      $region45: #{videogpt_ft_forward.3} parent=5 // pred_check
        %p667 = pneg %p666
      $region46: #{videogpt_ft_forward.3} parent=5 // pred_check_branch
        %669 = sbr.rel (%p667) target = $region48
      $region47: #{videogpt_ft_forward.3} parent=5 // pred_region
        %s670 = ssub.s32 %s11, 2
        // Predicated region
        $region49: #{videogpt_ft_forward.3} parent=47 // pred_check
          %p671 = pneg %p127
        $region50: #{videogpt_ft_forward.3} parent=47 // pred_check_branch
          %673 = sbr.rel (%p671) target = $region52
        $region51: #{videogpt_ft_forward.3} parent=47 // pred_region
          %s674 = smul.u32 16, %s23
          %p675 = scmp.lt.s32.totalorder %s22, 2
          %s676 = scalar_select %p675, %s22, 2
          %p677 = scmp.lt.s32.totalorder %s674, 15
          %s678 = scalar_select %p677, %s674, 15
          %s679 = smul.addr %s676, 16
          %s680 = sadd.s32 %s678, %s679
          %s681 = smul.addr %s680, 4
          %s682 = scalar_lea.vmem %s3, %s681
        $region52: #{videogpt_ft_forward.3} parent=47 // pred_fallthru
          _
      $region48: #{videogpt_ft_forward.3} parent=5 // pred_fallthru
        _
    $region6: #{videogpt_ft_forward.3} parent=1 // loop_footer
      %s15 = sadd.s32 1, %s11
    $region7: #{videogpt_ft_forward.3} parent=1 // loop_footer_branch
      %10 = sbr.rel target = $region3
    $region8: #{videogpt_ft_forward.3} parent=1 // loop_exit
      _
    %683 = vsyncpa [#allocation3], 1
    %s684 = scalar_lea.sflag [#allocation3], 1
    %685 = vsyncpa %s684, 1
    %686 = vsyncpa [#allocation5], 1

// kernel: videogpt_ft_forward.4
$region0: #{videogpt_ft_forward.4}
  #allocation0 [shape = 'u32[]', space=smem, size = 0x4, offset = 0x4, fixed_abs, tag = 'smem constant byte address 0x4 - core index']
  #allocation1 [shape = 'u32[144,128]{1,0:T(1,128)}', space=vmem, size = 0x12000, scoped, tag = 'internal scratch']
  %s0 = inlined_call_operand.vmem [shape: bf16[1024,64], index: 0, kind: input, shape index: {}]
  %s1 = inlined_call_operand.vmem [shape: bf16[64,128], index: 1, kind: input, shape index: {}]
  %s2 = inlined_call_operand.vmem [shape: bf16[128,128], index: 2, kind: input, shape index: {}]
  %s3 = inlined_call_operand.vmem [shape: bf16[1024,128], index: 3, kind: output, shape index: {}]
  %s4 = sld [smem:[#allocation0]]
  $region45: #{videogpt_ft_forward.4} parent=0
    _
  %s6 = ssub.s32 1, %s4
  %s7 = scalar_select 0, %s6, %s4
  loop: start=0, step=1, limit=6
  $region2: #{videogpt_ft_forward.4} parent=0 // loop_pre_header
    _
  $region3: #{videogpt_ft_forward.4} parent=0 // loop_header
    %s9 = sphi 0, %s13
    %p10 = scmp.ge.s32.totalorder %s9, 6
    %s19 = sphi 0, %s21
    %s22 = sphi 0, %s19
    %s23 = sphi 0, %s22
    %s39 = sphi 0, %s23
    %s43 = sphi 0, %s43
    %s45 = sphi 0, %s43
    %s46 = sphi 0, %s45
    %s60 = sphi 0, %s46
    %s64 = sphi 0, %s64
    %s66 = sphi 0, %s64
    %s67 = sphi 0, %s66
    %s81 = sphi 0, %s67
    %s87 = sphi 0, %s89
    %s90 = sphi 0, %s87
    %s91 = sphi 0, %s90
    %s107 = sphi 0, %s91
  $region4: #{videogpt_ft_forward.4} parent=0 // loop_header_branch
    %12 = sbr.rel (%p10) target = $region8
  $region5: #{videogpt_ft_forward.4} parent=0 // loop_body
    %s14 = ssub.s32 %s9, 1
    %s15 = ssub.s32 %s9, 2
    %s16 = sadd.s32 %s9, 1
    %s17 = ssub.s32 %s9, %s16
    %p18 = scmp.eq.s32.totalorder %s17, 0
    %s20 = sadd.s32 %s19, 1
    %s21 = scalar_select %p18, %s19, %s20
    %p24 = pneg %p18
    %p25 = scmp.eq.s32.totalorder %s9, 3
    %p26 = por %p24, %p25
    %p27 = scmp.ne.s32.totalorder %s19, %s22
    %p28 = scmp.eq.s32.totalorder %s9, 0
    %p29 = por %p27, %p28
    %p30 = scmp.ne.s32.totalorder %s19, %s22
    %p31 = scmp.eq.s32.totalorder %s14, 3
    %p32 = por %p30, %p31
    %p33 = scmp.ne.s32.totalorder %s22, %s23
    %p34 = scmp.eq.s32.totalorder %s14, 0
    %p35 = por %p33, %p34
    %p36 = scmp.ne.s32.totalorder %s22, %s23
    %p37 = scmp.eq.s32.totalorder %s15, 3
    %p38 = por %p36, %p37
    %p40 = scmp.ne.s32.totalorder %s23, %s39
    %p41 = scmp.eq.s32.totalorder %s15, 0
    %p42 = por %p40, %p41
    %s44 = sadd.s32 %s43, 1
    %p47 = scmp.eq.s32.totalorder %s9, 3
    %p48 = scmp.ne.s32.totalorder %s43, %s45
    %p49 = scmp.eq.s32.totalorder %s9, 0
    %p50 = por %p48, %p49
    %p51 = scmp.ne.s32.totalorder %s43, %s45
    %p52 = scmp.eq.s32.totalorder %s14, 3
    %p53 = por %p51, %p52
    %p54 = scmp.ne.s32.totalorder %s45, %s46
    %p55 = scmp.eq.s32.totalorder %s14, 0
    %p56 = por %p54, %p55
    %p57 = scmp.ne.s32.totalorder %s45, %s46
    %p58 = scmp.eq.s32.totalorder %s15, 3
    %p59 = por %p57, %p58
    %p61 = scmp.ne.s32.totalorder %s46, %s60
    %p62 = scmp.eq.s32.totalorder %s15, 0
    %p63 = por %p61, %p62
    %s65 = sadd.s32 %s64, 1
    %p68 = scmp.eq.s32.totalorder %s9, 3
    %p69 = scmp.ne.s32.totalorder %s64, %s66
    %p70 = scmp.eq.s32.totalorder %s9, 0
    %p71 = por %p69, %p70
    %p72 = scmp.ne.s32.totalorder %s64, %s66
    %p73 = scmp.eq.s32.totalorder %s14, 3
    %p74 = por %p72, %p73
    %p75 = scmp.ne.s32.totalorder %s66, %s67
    %p76 = scmp.eq.s32.totalorder %s14, 0
    %p77 = por %p75, %p76
    %p78 = scmp.ne.s32.totalorder %s66, %s67
    %p79 = scmp.eq.s32.totalorder %s15, 3
    %p80 = por %p78, %p79
    %p82 = scmp.ne.s32.totalorder %s67, %s81
    %p83 = scmp.eq.s32.totalorder %s15, 0
    %p84 = por %p82, %p83
    %s85 = ssub.s32 %s9, %s16
    %p86 = scmp.eq.s32.totalorder %s85, 0
    %s88 = sadd.s32 %s87, 1
    %s89 = scalar_select %p86, %s87, %s88
    %p92 = pneg %p86
    %p93 = scmp.eq.s32.totalorder %s9, 3
    %p94 = por %p92, %p93
    %p95 = scmp.ne.s32.totalorder %s87, %s90
    %p96 = scmp.eq.s32.totalorder %s9, 0
    %p97 = por %p95, %p96
    %p98 = scmp.ne.s32.totalorder %s87, %s90
    %p99 = scmp.eq.s32.totalorder %s14, 3
    %p100 = por %p98, %p99
    %p101 = scmp.ne.s32.totalorder %s90, %s91
    %p102 = scmp.eq.s32.totalorder %s14, 0
    %p103 = por %p101, %p102
    %p104 = scmp.ne.s32.totalorder %s90, %s91
    %p105 = scmp.eq.s32.totalorder %s15, 3
    %p106 = por %p104, %p105
    %p108 = scmp.ne.s32.totalorder %s91, %s107
    %p109 = scmp.eq.s32.totalorder %s15, 0
    %p110 = por %p108, %p109
    %p111 = scmp.le.s32.totalorder 1, %s9
    %p112 = scmp.lt.s32.totalorder %s9, 5
    %p113 = pnand %p111, %p112
    %p114 = pneg %p113
    // Predicated region
    $region9: #{videogpt_ft_forward.4} parent=5 // pred_check
      _
    $region10: #{videogpt_ft_forward.4} parent=5 // pred_check_branch
      %116 = sbr.rel (%p113) target = $region12
    $region11: #{videogpt_ft_forward.4} parent=5 // pred_region
      %s117 = ssub.s32 %s9, 1
      // Predicated region
      $region13: #{videogpt_ft_forward.4} parent=11 // pred_check
        %p118 = pneg %p56
      $region14: #{videogpt_ft_forward.4} parent=11 // pred_check_branch
        %120 = sbr.rel (%p118) target = $region16
      $region15: #{videogpt_ft_forward.4} parent=11 // pred_region
        _
      $region16: #{videogpt_ft_forward.4} parent=11 // pred_fallthru
        _
      // Predicated region
      $region17: #{videogpt_ft_forward.4} parent=11 // pred_check
        %p121 = pneg %p77
      $region18: #{videogpt_ft_forward.4} parent=11 // pred_check_branch
        %123 = sbr.rel (%p121) target = $region20
      $region19: #{videogpt_ft_forward.4} parent=11 // pred_region
        _
      $region20: #{videogpt_ft_forward.4} parent=11 // pred_fallthru
        _
    $region12: #{videogpt_ft_forward.4} parent=5 // pred_fallthru
      _
    %p124 = scmp.lt.s32.totalorder %s9, 4
    // Predicated region
    $region21: #{videogpt_ft_forward.4} parent=5 // pred_check
      %p125 = pneg %p124
    $region22: #{videogpt_ft_forward.4} parent=5 // pred_check_branch
      %127 = sbr.rel (%p125) target = $region24
    $region23: #{videogpt_ft_forward.4} parent=5 // pred_region
      // Predicated region
      $region25: #{videogpt_ft_forward.4} parent=23 // pred_check
        %p128 = pneg %p29
      $region26: #{videogpt_ft_forward.4} parent=23 // pred_check_branch
        %130 = sbr.rel (%p128) target = $region28
      $region27: #{videogpt_ft_forward.4} parent=23 // pred_region
        %s131 = smul.u32 32, %s9
        %p132 = scmp.lt.s32.totalorder %s131, 127
        %s133 = scalar_select %p132, %s131, 127
        %s134 = smul.addr %s133, 4
        %s135 = scalar_lea.vmem %s0, %s134
        %s136 = smul.u32 32, %s9
      $region28: #{videogpt_ft_forward.4} parent=23 // pred_fallthru
        _
    $region24: #{videogpt_ft_forward.4} parent=5 // pred_fallthru
      _
    %p137 = scmp.le.s32.totalorder 1, %s9
    %p138 = scmp.lt.s32.totalorder %s9, 5
    %p139 = pnand %p137, %p138
    %p140 = pneg %p139
    // Predicated region
    $region29: #{videogpt_ft_forward.4} parent=5 // pred_check
      _
    $region30: #{videogpt_ft_forward.4} parent=5 // pred_check_branch
      %142 = sbr.rel (%p139) target = $region32
    $region31: #{videogpt_ft_forward.4} parent=5 // pred_region
      %s143 = ssub.s32 %s9, 1
      %s144 = smul.u32 32, %s14
      %p145 = scmp.lt.s32.totalorder %s144, 127
      %s146 = scalar_select %p145, %s144, 127
      %s147 = smul.addr %s146, 4
      %s148 = scalar_lea.vmem %s0, %s147
      %p149 = pneg %p35
      %p150 = pneg %p32
      %p151 = pneg %p56
      %p152 = pneg %p53
      %p153 = pneg %p77
      %p154 = pneg %p74
      %p155 = pneg %p103
      %p156 = pneg %p100
      %s157 = smul.u32 32, %s14
      %p158 = scmp.lt.s32.totalorder %s157, 127
      %s159 = scalar_select %p158, %s157, 127
      %s160 = smul.addr %s159, 4
      %s161 = scalar_lea.vmem %s3, %s160
      %s162 = smul.u32 32, %s14
      %p163 = scmp.lt.s32.totalorder %s162, 127
      %s164 = scalar_select %p163, %s162, 127
      %s165 = smul.addr %s164, 4
      %s166 = scalar_lea.vmem %s0, %s165
      %s167 = smul.u32 32, %s14
      %s168 = smul.u32 32, %s14
      %p169 = scmp.lt.s32.totalorder %s168, 127
      %s170 = scalar_select %p169, %s168, 127
      %s171 = smul.addr %s170, 4
      %s172 = scalar_lea.vmem %s3, %s171
      %s173 = smul.u32 32, %s14
      %v175 = vld [vmem:[%s166] sm:$0xf]
      %v176 = vld [vmem:[%s166 + $0x4] sm:$0xf]
      %v177 = vld [vmem:[%s166 + $0x8] sm:$0xf]
      %v178 = vld [vmem:[%s166 + $0xc] sm:$0xf]
      %v179 = vld [vmem:[%s166 + $0x10] sm:$0xf]
      %v180 = vld [vmem:[%s166 + $0x14] sm:$0xf]
      %v181 = vld [vmem:[%s166 + $0x18] sm:$0xf]
      %v182 = vld [vmem:[%s166 + $0x1c] sm:$0xf]
      %v183 = vld [vmem:[%s166 + $0x20] sm:$0xf]
      %v184 = vld [vmem:[%s166 + $0x24] sm:$0xf]
      %v185 = vld [vmem:[%s166 + $0x28] sm:$0xf]
      %v186 = vld [vmem:[%s166 + $0x2c] sm:$0xf]
      %v187 = vld [vmem:[%s166 + $0x30] sm:$0xf]
      %v188 = vld [vmem:[%s166 + $0x34] sm:$0xf]
      %v189 = vld [vmem:[%s166 + $0x38] sm:$0xf]
      %v190 = vld [vmem:[%s166 + $0x3c] sm:$0xf]
      %v191 = vld [vmem:[%s166 + $0x40] sm:$0xf]
      %v192 = vld [vmem:[%s166 + $0x44] sm:$0xf]
      %v193 = vld [vmem:[%s166 + $0x48] sm:$0xf]
      %v194 = vld [vmem:[%s166 + $0x4c] sm:$0xf]
      %v195 = vld [vmem:[%s166 + $0x50] sm:$0xf]
      %v196 = vld [vmem:[%s166 + $0x54] sm:$0xf]
      %v197 = vld [vmem:[%s166 + $0x58] sm:$0xf]
      %v198 = vld [vmem:[%s166 + $0x5c] sm:$0xf]
      %v199 = vld [vmem:[%s166 + $0x60] sm:$0xf]
      %v200 = vld [vmem:[%s166 + $0x64] sm:$0xf]
      %v201 = vld [vmem:[%s166 + $0x68] sm:$0xf]
      %v202 = vld [vmem:[%s166 + $0x6c] sm:$0xf]
      %v203 = vld [vmem:[%s166 + $0x70] sm:$0xf]
      %v204 = vld [vmem:[%s166 + $0x74] sm:$0xf]
      %v205 = vld [vmem:[%s166 + $0x78] sm:$0xf]
      %v206 = vld [vmem:[%s166 + $0x7c] sm:$0xf]
      %v207 = vld [vmem:[%s1] sm:$0xf]
      %v208 = vld [vmem:[%s1 + $0x4] sm:$0xf]
      %v209 = vld [vmem:[%s1 + $0x8] sm:$0xf]
      %v210 = vld [vmem:[%s1 + $0xc] sm:$0xf]
      %v211 = vld [vmem:[%s1 + $0x10] sm:$0xf]
      %v212 = vld [vmem:[%s1 + $0x14] sm:$0xf]
      %v213 = vld [vmem:[%s1 + $0x18] sm:$0xf]
      %v214 = vld [vmem:[%s1 + $0x1c] sm:$0xf]
      %v247 = vunpack.c.l.b16 %v175
      %v248 = vunpack.c.l.b16 %v176
      %v249 = vunpack.c.l.b16 %v177
      %v250 = vunpack.c.l.b16 %v178
      %v251 = vunpack.c.l.b16 %v179
      %v252 = vunpack.c.l.b16 %v180
      %v253 = vunpack.c.l.b16 %v181
      %v254 = vunpack.c.l.b16 %v182
      %v255 = vunpack.c.l.b16 %v183
      %v256 = vunpack.c.l.b16 %v184
      %v257 = vunpack.c.l.b16 %v185
      %v258 = vunpack.c.l.b16 %v186
      %v259 = vunpack.c.l.b16 %v187
      %v260 = vunpack.c.l.b16 %v188
      %v261 = vunpack.c.l.b16 %v189
      %v262 = vunpack.c.l.b16 %v190
      %v263 = vunpack.c.l.b16 %v191
      %v264 = vunpack.c.l.b16 %v192
      %v265 = vunpack.c.l.b16 %v193
      %v266 = vunpack.c.l.b16 %v194
      %v267 = vunpack.c.l.b16 %v195
      %v268 = vunpack.c.l.b16 %v196
      %v269 = vunpack.c.l.b16 %v197
      %v270 = vunpack.c.l.b16 %v198
      %v271 = vunpack.c.l.b16 %v199
      %v272 = vunpack.c.l.b16 %v200
      %v273 = vunpack.c.l.b16 %v201
      %v274 = vunpack.c.l.b16 %v202
      %v275 = vunpack.c.l.b16 %v203
      %v276 = vunpack.c.l.b16 %v204
      %v277 = vunpack.c.l.b16 %v205
      %v278 = vunpack.c.l.b16 %v206
      %v279 = vpack.c.b16 %v248, %v247
      %v280 = vpack.c.b16 %v250, %v249
      %v281 = vpack.c.b16 %v252, %v251
      %v282 = vpack.c.b16 %v254, %v253
      %v283 = vpack.c.b16 %v256, %v255
      %v284 = vpack.c.b16 %v258, %v257
      %v285 = vpack.c.b16 %v260, %v259
      %v286 = vpack.c.b16 %v262, %v261
      %v287 = vpack.c.b16 %v264, %v263
      %v288 = vpack.c.b16 %v266, %v265
      %v289 = vpack.c.b16 %v268, %v267
      %v290 = vpack.c.b16 %v270, %v269
      %v291 = vpack.c.b16 %v272, %v271
      %v292 = vpack.c.b16 %v274, %v273
      %v293 = vpack.c.b16 %v276, %v275
      %v294 = vpack.c.b16 %v278, %v277
      %v303 = vunpack.c.l.b16 %v207
      %v304 = vunpack.c.l.b16 %v208
      %v305 = vunpack.c.l.b16 %v209
      %v306 = vunpack.c.l.b16 %v210
      %v307 = vunpack.c.l.b16 %v211
      %v308 = vunpack.c.l.b16 %v212
      %v309 = vunpack.c.l.b16 %v213
      %v310 = vunpack.c.l.b16 %v214
      %v311 = vpack.c.b16 %v304, %v303
      %v312 = vpack.c.b16 %v306, %v305
      %v313 = vpack.c.b16 %v308, %v307
      %v314 = vpack.c.b16 %v310, %v309
      %vm319 = vcmask 523264
      %v321 = vsel %vm319, %v279, 0
      %v324 = vsel %vm319, %v280, 0
      %v327 = vsel %vm319, %v281, 0
      %v330 = vsel %vm319, %v282, 0
      %v333 = vsel %vm319, %v283, 0
      %v336 = vsel %vm319, %v284, 0
      %v339 = vsel %vm319, %v285, 0
      %v342 = vsel %vm319, %v286, 0
      %v345 = vsel %vm319, %v287, 0
      %v348 = vsel %vm319, %v288, 0
      %v351 = vsel %vm319, %v289, 0
      %v354 = vsel %vm319, %v290, 0
      %v357 = vsel %vm319, %v291, 0
      %v360 = vsel %vm319, %v292, 0
      %v363 = vsel %vm319, %v293, 0
      %v366 = vsel %vm319, %v294, 0
      %368 = vmatprep.subr.bf16.mxu0 0
      %369 = vmatpush1.bf16.msra.mxu0 %v311
      %370 = vmatprep.subr.bf16.mxu0 0
      %371 = vmatpush1.bf16.msra.mxu0 %v312
      %372 = vmatprep.subr.bf16.mxu0 0
      %373 = vmatpush1.bf16.msra.mxu0 %v313
      %374 = vmatprep.subr.bf16.mxu0 0
      %375 = vmatpush1.bf16.msra.mxu0 %v314
      %376 = vmatprep.subr.bf16.mxu0 0
      %377 = vmatpush1.bf16.msra.mxu0 0
      %378 = vmatprep.subr.bf16.mxu0 0
      %379 = vmatpush1.bf16.msra.mxu0 0
      %380 = vmatprep.subr.bf16.mxu0 0
      %381 = vmatpush1.bf16.msra.mxu0 0
      %382 = vmatprep.subr.bf16.mxu0 0
      %383 = vmatpush1.bf16.msra.mxu0 0
      %384 = vmatprep.subr.bf16.mxu0 0
      %385 = vmatpush1.bf16.msra.mxu0 0
      %386 = vmatprep.subr.bf16.mxu0 0
      %387 = vmatpush1.bf16.msra.mxu0 0
      %388 = vmatprep.subr.bf16.mxu0 0
      %389 = vmatpush1.bf16.msra.mxu0 0
      %390 = vmatprep.subr.bf16.mxu0 0
      %391 = vmatpush1.bf16.msra.mxu0 0
      %392 = vmatprep.subr.bf16.mxu0 0
      %393 = vmatpush1.bf16.msra.mxu0 0
      %394 = vmatprep.subr.bf16.mxu0 0
      %395 = vmatpush1.bf16.msra.mxu0 0
      %396 = vmatprep.subr.bf16.mxu0 0
      %397 = vmatpush1.bf16.msra.mxu0 0
      %398 = vmatprep.subr.bf16.mxu0 0
      %399 = vmatpush1.bf16.msra.mxu0 0
      %400 = vmatprep.mubr.bf16.mxu0 0
      %401 = vmatmul.mubr.bf16.gmra.mrb[0].mxu0 %v321
      %v402 = vpop.f32.mrb[0].mxu0
      %v403 = vadd.f32 0.0, %v402
      %v404 = vpop.f32.mrb[0].mxu0
      %v405 = vpop.f32.mrb[0].mxu0
      %v406 = vadd.f32 0.0, %v405
      %v407 = vpop.f32.mrb[0].mxu0
      %408 = vmatprep.mubr.bf16.mxu0 0
      %409 = vmatmul.mubr.bf16.gmra.mrb[0].mxu0 %v324
      %v410 = vpop.f32.mrb[0].mxu0
      %v411 = vadd.f32 0.0, %v410
      %v412 = vpop.f32.mrb[0].mxu0
      %v413 = vpop.f32.mrb[0].mxu0
      %v414 = vadd.f32 0.0, %v413
      %v415 = vpop.f32.mrb[0].mxu0
      %416 = vmatprep.mubr.bf16.mxu0 0
      %417 = vmatmul.mubr.bf16.gmra.mrb[0].mxu0 %v327
      %v418 = vpop.f32.mrb[0].mxu0
      %v419 = vadd.f32 0.0, %v418
      %v420 = vpop.f32.mrb[0].mxu0
      %v421 = vpop.f32.mrb[0].mxu0
      %v422 = vadd.f32 0.0, %v421
      %v423 = vpop.f32.mrb[0].mxu0
      %424 = vmatprep.mubr.bf16.mxu0 0
      %425 = vmatmul.mubr.bf16.gmra.mrb[0].mxu0 %v330
      %v426 = vpop.f32.mrb[0].mxu0
      %v427 = vadd.f32 0.0, %v426
      %v428 = vpop.f32.mrb[0].mxu0
      %v429 = vpop.f32.mrb[0].mxu0
      %v430 = vadd.f32 0.0, %v429
      %v431 = vpop.f32.mrb[0].mxu0
      %432 = vmatprep.mubr.bf16.mxu0 0
      %433 = vmatmul.mubr.bf16.gmra.mrb[0].mxu0 %v333
      %v434 = vpop.f32.mrb[0].mxu0
      %v435 = vadd.f32 0.0, %v434
      %v436 = vpop.f32.mrb[0].mxu0
      %v437 = vpop.f32.mrb[0].mxu0
      %v438 = vadd.f32 0.0, %v437
      %v439 = vpop.f32.mrb[0].mxu0
      %440 = vmatprep.mubr.bf16.mxu0 0
      %441 = vmatmul.mubr.bf16.gmra.mrb[0].mxu0 %v336
      %v442 = vpop.f32.mrb[0].mxu0
      %v443 = vadd.f32 0.0, %v442
      %v444 = vpop.f32.mrb[0].mxu0
      %v445 = vpop.f32.mrb[0].mxu0
      %v446 = vadd.f32 0.0, %v445
      %v447 = vpop.f32.mrb[0].mxu0
      %448 = vmatprep.mubr.bf16.mxu0 0
      %449 = vmatmul.mubr.bf16.gmra.mrb[0].mxu0 %v339
      %v450 = vpop.f32.mrb[0].mxu0
      %v451 = vadd.f32 0.0, %v450
      %v452 = vpop.f32.mrb[0].mxu0
      %v453 = vpop.f32.mrb[0].mxu0
      %v454 = vadd.f32 0.0, %v453
      %v455 = vpop.f32.mrb[0].mxu0
      %456 = vmatprep.mubr.bf16.mxu0 0
      %457 = vmatmul.mubr.bf16.gmra.mrb[0].mxu0 %v342
      %v458 = vpop.f32.mrb[0].mxu0
      %v459 = vadd.f32 0.0, %v458
      %v460 = vpop.f32.mrb[0].mxu0
      %v461 = vpop.f32.mrb[0].mxu0
      %v462 = vadd.f32 0.0, %v461
      %v463 = vpop.f32.mrb[0].mxu0
      %464 = vmatprep.mubr.bf16.mxu0 0
      %465 = vmatmul.mubr.bf16.gmra.mrb[0].mxu0 %v345
      %v466 = vpop.f32.mrb[0].mxu0
      %v467 = vadd.f32 0.0, %v466
      %v468 = vpop.f32.mrb[0].mxu0
      %v469 = vpop.f32.mrb[0].mxu0
      %v470 = vadd.f32 0.0, %v469
      %v471 = vpop.f32.mrb[0].mxu0
      %472 = vmatprep.mubr.bf16.mxu0 0
      %473 = vmatmul.mubr.bf16.gmra.mrb[0].mxu0 %v348
      %v474 = vpop.f32.mrb[0].mxu0
      %v475 = vadd.f32 0.0, %v474
      %v476 = vpop.f32.mrb[0].mxu0
      %v477 = vpop.f32.mrb[0].mxu0
      %v478 = vadd.f32 0.0, %v477
      %v479 = vpop.f32.mrb[0].mxu0
      %480 = vmatprep.mubr.bf16.mxu0 0
      %481 = vmatmul.mubr.bf16.gmra.mrb[0].mxu0 %v351
      %v482 = vpop.f32.mrb[0].mxu0
      %v483 = vadd.f32 0.0, %v482
      %v484 = vpop.f32.mrb[0].mxu0
      %v485 = vpop.f32.mrb[0].mxu0
      %v486 = vadd.f32 0.0, %v485
      %v487 = vpop.f32.mrb[0].mxu0
      %488 = vmatprep.mubr.bf16.mxu0 0
      %489 = vmatmul.mubr.bf16.gmra.mrb[0].mxu0 %v354
      %v490 = vpop.f32.mrb[0].mxu0
      %v491 = vadd.f32 0.0, %v490
      %v492 = vpop.f32.mrb[0].mxu0
      %v493 = vpop.f32.mrb[0].mxu0
      %v494 = vadd.f32 0.0, %v493
      %v495 = vpop.f32.mrb[0].mxu0
      %496 = vmatprep.mubr.bf16.mxu0 0
      %497 = vmatmul.mubr.bf16.gmra.mrb[0].mxu0 %v357
      %v498 = vpop.f32.mrb[0].mxu0
      %v499 = vadd.f32 0.0, %v498
      %v500 = vpop.f32.mrb[0].mxu0
      %v501 = vpop.f32.mrb[0].mxu0
      %v502 = vadd.f32 0.0, %v501
      %v503 = vpop.f32.mrb[0].mxu0
      %504 = vmatprep.mubr.bf16.mxu0 0
      %505 = vmatmul.mubr.bf16.gmra.mrb[0].mxu0 %v360
      %v506 = vpop.f32.mrb[0].mxu0
      %v507 = vadd.f32 0.0, %v506
      %v508 = vpop.f32.mrb[0].mxu0
      %v509 = vpop.f32.mrb[0].mxu0
      %v510 = vadd.f32 0.0, %v509
      %v511 = vpop.f32.mrb[0].mxu0
      %512 = vmatprep.mubr.bf16.mxu0 0
      %513 = vmatmul.mubr.bf16.gmra.mrb[0].mxu0 %v363
      %v514 = vpop.f32.mrb[0].mxu0
      %v515 = vadd.f32 0.0, %v514
      %v516 = vpop.f32.mrb[0].mxu0
      %v517 = vpop.f32.mrb[0].mxu0
      %v518 = vadd.f32 0.0, %v517
      %v519 = vpop.f32.mrb[0].mxu0
      %520 = vmatprep.mubr.bf16.mxu0 0
      %521 = vmatmul.mubr.bf16.gmra.mrb[0].mxu0 %v366
      %v522 = vpop.f32.mrb[0].mxu0
      %v523 = vadd.f32 0.0, %v522
      %v524 = vpop.f32.mrb[0].mxu0
      %v525 = vpop.f32.mrb[0].mxu0
      %v526 = vadd.f32 0.0, %v525
      %v527 = vpop.f32.mrb[0].mxu0
      %528 = vdwg.mxu0
      %v529 = vmax.f32 %v403, 0.0
      %v530 = vmax.f32 %v406, 0.0
      %v531 = vmax.f32 %v411, 0.0
      %v532 = vmax.f32 %v414, 0.0
      %v533 = vmax.f32 %v419, 0.0
      %v534 = vmax.f32 %v422, 0.0
      %v535 = vmax.f32 %v427, 0.0
      %v536 = vmax.f32 %v430, 0.0
      %v537 = vmax.f32 %v435, 0.0
      %v538 = vmax.f32 %v438, 0.0
      %v539 = vmax.f32 %v443, 0.0
      %v540 = vmax.f32 %v446, 0.0
      %v541 = vmax.f32 %v451, 0.0
      %v542 = vmax.f32 %v454, 0.0
      %v543 = vmax.f32 %v459, 0.0
      %v544 = vmax.f32 %v462, 0.0
      %v545 = vmax.f32 %v467, 0.0
      %v546 = vmax.f32 %v470, 0.0
      %v547 = vmax.f32 %v475, 0.0
      %v548 = vmax.f32 %v478, 0.0
      %v549 = vmax.f32 %v483, 0.0
      %v550 = vmax.f32 %v486, 0.0
      %v551 = vmax.f32 %v491, 0.0
      %v552 = vmax.f32 %v494, 0.0
      %v553 = vmax.f32 %v499, 0.0
      %v554 = vmax.f32 %v502, 0.0
      %v555 = vmax.f32 %v507, 0.0
      %v556 = vmax.f32 %v510, 0.0
      %v557 = vmax.f32 %v515, 0.0
      %v558 = vmax.f32 %v518, 0.0
      %v559 = vmax.f32 %v523, 0.0
      %v560 = vmax.f32 %v526, 0.0
      %v561 = vpack.c.bf16 %v530, %v529
      %v562 = vpack.c.bf16 %v532, %v531
      %v563 = vpack.c.bf16 %v534, %v533
      %v564 = vpack.c.bf16 %v536, %v535
      %v565 = vpack.c.bf16 %v538, %v537
      %v566 = vpack.c.bf16 %v540, %v539
      %v567 = vpack.c.bf16 %v542, %v541
      %v568 = vpack.c.bf16 %v544, %v543
      %v569 = vpack.c.bf16 %v546, %v545
      %v570 = vpack.c.bf16 %v548, %v547
      %v571 = vpack.c.bf16 %v550, %v549
      %v572 = vpack.c.bf16 %v552, %v551
      %v573 = vpack.c.bf16 %v554, %v553
      %v574 = vpack.c.bf16 %v556, %v555
      %v575 = vpack.c.bf16 %v558, %v557
      %v576 = vpack.c.bf16 %v560, %v559
      %v577 = vld [vmem:[%s2] sm:$0xf]
      %v578 = vld [vmem:[%s2 + $0x4] sm:$0xf]
      %v579 = vld [vmem:[%s2 + $0x8] sm:$0xf]
      %v580 = vld [vmem:[%s2 + $0xc] sm:$0xf]
      %v581 = vld [vmem:[%s2 + $0x10] sm:$0xf]
      %v582 = vld [vmem:[%s2 + $0x14] sm:$0xf]
      %v583 = vld [vmem:[%s2 + $0x18] sm:$0xf]
      %v584 = vld [vmem:[%s2 + $0x1c] sm:$0xf]
      %v585 = vld [vmem:[%s2 + $0x20] sm:$0xf]
      %v586 = vld [vmem:[%s2 + $0x24] sm:$0xf]
      %v587 = vld [vmem:[%s2 + $0x28] sm:$0xf]
      %v588 = vld [vmem:[%s2 + $0x2c] sm:$0xf]
      %v589 = vld [vmem:[%s2 + $0x30] sm:$0xf]
      %v590 = vld [vmem:[%s2 + $0x34] sm:$0xf]
      %v591 = vld [vmem:[%s2 + $0x38] sm:$0xf]
      %v592 = vld [vmem:[%s2 + $0x3c] sm:$0xf]
      %v609 = vunpack.c.l.b16 %v577
      %v610 = vunpack.c.l.b16 %v578
      %v611 = vunpack.c.l.b16 %v579
      %v612 = vunpack.c.l.b16 %v580
      %v613 = vunpack.c.l.b16 %v581
      %v614 = vunpack.c.l.b16 %v582
      %v615 = vunpack.c.l.b16 %v583
      %v616 = vunpack.c.l.b16 %v584
      %v617 = vunpack.c.l.b16 %v585
      %v618 = vunpack.c.l.b16 %v586
      %v619 = vunpack.c.l.b16 %v587
      %v620 = vunpack.c.l.b16 %v588
      %v621 = vunpack.c.l.b16 %v589
      %v622 = vunpack.c.l.b16 %v590
      %v623 = vunpack.c.l.b16 %v591
      %v624 = vunpack.c.l.b16 %v592
      %v625 = vpack.c.b16 %v610, %v609
      %v626 = vpack.c.b16 %v612, %v611
      %v627 = vpack.c.b16 %v614, %v613
      %v628 = vpack.c.b16 %v616, %v615
      %v629 = vpack.c.b16 %v618, %v617
      %v630 = vpack.c.b16 %v620, %v619
      %v631 = vpack.c.b16 %v622, %v621
      %v632 = vpack.c.b16 %v624, %v623
      %641 = vmatprep.subr.bf16.mxu0 0
      %642 = vmatpush1.bf16.msra.mxu0 %v625
      %643 = vmatprep.subr.bf16.mxu0 0
      %644 = vmatpush1.bf16.msra.mxu0 %v626
      %645 = vmatprep.subr.bf16.mxu0 0
      %646 = vmatpush1.bf16.msra.mxu0 %v627
      %647 = vmatprep.subr.bf16.mxu0 0
      %648 = vmatpush1.bf16.msra.mxu0 %v628
      %649 = vmatprep.subr.bf16.mxu0 0
      %650 = vmatpush1.bf16.msra.mxu0 %v629
      %651 = vmatprep.subr.bf16.mxu0 0
      %652 = vmatpush1.bf16.msra.mxu0 %v630
      %653 = vmatprep.subr.bf16.mxu0 0
      %654 = vmatpush1.bf16.msra.mxu0 %v631
      %655 = vmatprep.subr.bf16.mxu0 0
      %656 = vmatpush1.bf16.msra.mxu0 %v632
      %657 = vmatprep.subr.bf16.mxu0 0
      %658 = vmatpush1.bf16.msra.mxu0 0
      %659 = vmatprep.subr.bf16.mxu0 0
      %660 = vmatpush1.bf16.msra.mxu0 0
      %661 = vmatprep.subr.bf16.mxu0 0
      %662 = vmatpush1.bf16.msra.mxu0 0
      %663 = vmatprep.subr.bf16.mxu0 0
      %664 = vmatpush1.bf16.msra.mxu0 0
      %665 = vmatprep.subr.bf16.mxu0 0
      %666 = vmatpush1.bf16.msra.mxu0 0
      %667 = vmatprep.subr.bf16.mxu0 0
      %668 = vmatpush1.bf16.msra.mxu0 0
      %669 = vmatprep.subr.bf16.mxu0 0
      %670 = vmatpush1.bf16.msra.mxu0 0
      %671 = vmatprep.subr.bf16.mxu0 0
      %672 = vmatpush1.bf16.msra.mxu0 0
      %673 = vmatprep.mubr.bf16.mxu0 0
      %674 = vmatmul.mubr.bf16.gmra.mrb[0].mxu0 %v561
      %v675 = vpop.f32.mrb[0].mxu0
      %v676 = vadd.f32 0.0, %v675
      %v677 = vpop.f32.mrb[0].mxu0
      %v678 = vpop.f32.mrb[0].mxu0
      %v679 = vadd.f32 0.0, %v678
      %v680 = vpop.f32.mrb[0].mxu0
      %681 = vmatprep.mubr.bf16.mxu0 0
      %682 = vmatmul.mubr.bf16.gmra.mrb[0].mxu0 %v562
      %v683 = vpop.f32.mrb[0].mxu0
      %v684 = vadd.f32 0.0, %v683
      %v685 = vpop.f32.mrb[0].mxu0
      %v686 = vpop.f32.mrb[0].mxu0
      %v687 = vadd.f32 0.0, %v686
      %v688 = vpop.f32.mrb[0].mxu0
      %689 = vmatprep.mubr.bf16.mxu0 0
      %690 = vmatmul.mubr.bf16.gmra.mrb[0].mxu0 %v563
      %v691 = vpop.f32.mrb[0].mxu0
      %v692 = vadd.f32 0.0, %v691
      %v693 = vpop.f32.mrb[0].mxu0
      %v694 = vpop.f32.mrb[0].mxu0
      %v695 = vadd.f32 0.0, %v694
      %v696 = vpop.f32.mrb[0].mxu0
      %697 = vmatprep.mubr.bf16.mxu0 0
      %698 = vmatmul.mubr.bf16.gmra.mrb[0].mxu0 %v564
      %v699 = vpop.f32.mrb[0].mxu0
      %v700 = vadd.f32 0.0, %v699
      %v701 = vpop.f32.mrb[0].mxu0
      %v702 = vpop.f32.mrb[0].mxu0
      %v703 = vadd.f32 0.0, %v702
      %v704 = vpop.f32.mrb[0].mxu0
      %705 = vmatprep.mubr.bf16.mxu0 0
      %706 = vmatmul.mubr.bf16.gmra.mrb[0].mxu0 %v565
      %v707 = vpop.f32.mrb[0].mxu0
      %v708 = vadd.f32 0.0, %v707
      %v709 = vpop.f32.mrb[0].mxu0
      %v710 = vpop.f32.mrb[0].mxu0
      %v711 = vadd.f32 0.0, %v710
      %v712 = vpop.f32.mrb[0].mxu0
      %713 = vmatprep.mubr.bf16.mxu0 0
      %714 = vmatmul.mubr.bf16.gmra.mrb[0].mxu0 %v566
      %v715 = vpop.f32.mrb[0].mxu0
      %v716 = vadd.f32 0.0, %v715
      %v717 = vpop.f32.mrb[0].mxu0
      %v718 = vpop.f32.mrb[0].mxu0
      %v719 = vadd.f32 0.0, %v718
      %v720 = vpop.f32.mrb[0].mxu0
      %721 = vmatprep.mubr.bf16.mxu0 0
      %722 = vmatmul.mubr.bf16.gmra.mrb[0].mxu0 %v567
      %v723 = vpop.f32.mrb[0].mxu0
      %v724 = vadd.f32 0.0, %v723
      %v725 = vpop.f32.mrb[0].mxu0
      %v726 = vpop.f32.mrb[0].mxu0
      %v727 = vadd.f32 0.0, %v726
      %v728 = vpop.f32.mrb[0].mxu0
      %729 = vmatprep.mubr.bf16.mxu0 0
      %730 = vmatmul.mubr.bf16.gmra.mrb[0].mxu0 %v568
      %v731 = vpop.f32.mrb[0].mxu0
      %v732 = vadd.f32 0.0, %v731
      %v733 = vpop.f32.mrb[0].mxu0
      %v734 = vpop.f32.mrb[0].mxu0
      %v735 = vadd.f32 0.0, %v734
      %v736 = vpop.f32.mrb[0].mxu0
      %737 = vmatprep.mubr.bf16.mxu0 0
      %738 = vmatmul.mubr.bf16.gmra.mrb[0].mxu0 %v569
      %v739 = vpop.f32.mrb[0].mxu0
      %v740 = vadd.f32 0.0, %v739
      %v741 = vpop.f32.mrb[0].mxu0
      %v742 = vpop.f32.mrb[0].mxu0
      %v743 = vadd.f32 0.0, %v742
      %v744 = vpop.f32.mrb[0].mxu0
      %745 = vmatprep.mubr.bf16.mxu0 0
      %746 = vmatmul.mubr.bf16.gmra.mrb[0].mxu0 %v570
      %v747 = vpop.f32.mrb[0].mxu0
      %v748 = vadd.f32 0.0, %v747
      %v749 = vpop.f32.mrb[0].mxu0
      %v750 = vpop.f32.mrb[0].mxu0
      %v751 = vadd.f32 0.0, %v750
      %v752 = vpop.f32.mrb[0].mxu0
      %753 = vmatprep.mubr.bf16.mxu0 0
      %754 = vmatmul.mubr.bf16.gmra.mrb[0].mxu0 %v571
      %v755 = vpop.f32.mrb[0].mxu0
      %v756 = vadd.f32 0.0, %v755
      %v757 = vpop.f32.mrb[0].mxu0
      %v758 = vpop.f32.mrb[0].mxu0
      %v759 = vadd.f32 0.0, %v758
      %v760 = vpop.f32.mrb[0].mxu0
      %761 = vmatprep.mubr.bf16.mxu0 0
      %762 = vmatmul.mubr.bf16.gmra.mrb[0].mxu0 %v572
      %v763 = vpop.f32.mrb[0].mxu0
      %v764 = vadd.f32 0.0, %v763
      %v765 = vpop.f32.mrb[0].mxu0
      %v766 = vpop.f32.mrb[0].mxu0
      %v767 = vadd.f32 0.0, %v766
      %v768 = vpop.f32.mrb[0].mxu0
      %769 = vmatprep.mubr.bf16.mxu0 0
      %770 = vmatmul.mubr.bf16.gmra.mrb[0].mxu0 %v573
      %v771 = vpop.f32.mrb[0].mxu0
      %v772 = vadd.f32 0.0, %v771
      %v773 = vpop.f32.mrb[0].mxu0
      %v774 = vpop.f32.mrb[0].mxu0
      %v775 = vadd.f32 0.0, %v774
      %v776 = vpop.f32.mrb[0].mxu0
      %777 = vmatprep.mubr.bf16.mxu0 0
      %778 = vmatmul.mubr.bf16.gmra.mrb[0].mxu0 %v574
      %v779 = vpop.f32.mrb[0].mxu0
      %v780 = vadd.f32 0.0, %v779
      %v781 = vpop.f32.mrb[0].mxu0
      %v782 = vpop.f32.mrb[0].mxu0
      %v783 = vadd.f32 0.0, %v782
      %v784 = vpop.f32.mrb[0].mxu0
      %785 = vmatprep.mubr.bf16.mxu0 0
      %786 = vmatmul.mubr.bf16.gmra.mrb[0].mxu0 %v575
      %v787 = vpop.f32.mrb[0].mxu0
      %v788 = vadd.f32 0.0, %v787
      %v789 = vpop.f32.mrb[0].mxu0
      %v790 = vpop.f32.mrb[0].mxu0
      %v791 = vadd.f32 0.0, %v790
      %v792 = vpop.f32.mrb[0].mxu0
      %793 = vmatprep.mubr.bf16.mxu0 0
      %794 = vmatmul.mubr.bf16.gmra.mrb[0].mxu0 %v576
      %v795 = vpop.f32.mrb[0].mxu0
      %v796 = vadd.f32 0.0, %v795
      %v797 = vpop.f32.mrb[0].mxu0
      %v798 = vpop.f32.mrb[0].mxu0
      %v799 = vadd.f32 0.0, %v798
      %v800 = vpop.f32.mrb[0].mxu0
      %801 = vdwg.mxu0
      %v802 = vadd.f32 %v403, %v676
      %v803 = vadd.f32 %v406, %v679
      %v804 = vadd.f32 %v411, %v684
      %v805 = vadd.f32 %v414, %v687
      %v806 = vadd.f32 %v419, %v692
      %v807 = vadd.f32 %v422, %v695
      %v808 = vadd.f32 %v427, %v700
      %v809 = vadd.f32 %v430, %v703
      %v810 = vadd.f32 %v435, %v708
      %v811 = vadd.f32 %v438, %v711
      %v812 = vadd.f32 %v443, %v716
      %v813 = vadd.f32 %v446, %v719
      %v814 = vadd.f32 %v451, %v724
      %v815 = vadd.f32 %v454, %v727
      %v816 = vadd.f32 %v459, %v732
      %v817 = vadd.f32 %v462, %v735
      %v818 = vadd.f32 %v467, %v740
      %v819 = vadd.f32 %v470, %v743
      %v820 = vadd.f32 %v475, %v748
      %v821 = vadd.f32 %v478, %v751
      %v822 = vadd.f32 %v483, %v756
      %v823 = vadd.f32 %v486, %v759
      %v824 = vadd.f32 %v491, %v764
      %v825 = vadd.f32 %v494, %v767
      %v826 = vadd.f32 %v499, %v772
      %v827 = vadd.f32 %v502, %v775
      %v828 = vadd.f32 %v507, %v780
      %v829 = vadd.f32 %v510, %v783
      %v830 = vadd.f32 %v515, %v788
      %v831 = vadd.f32 %v518, %v791
      %v832 = vadd.f32 %v523, %v796
      %v833 = vadd.f32 %v526, %v799
      %v834 = vpack.c.bf16 %v803, %v802
      %v835 = vpack.c.bf16 %v805, %v804
      %v836 = vpack.c.bf16 %v807, %v806
      %v837 = vpack.c.bf16 %v809, %v808
      %v838 = vpack.c.bf16 %v811, %v810
      %v839 = vpack.c.bf16 %v813, %v812
      %v840 = vpack.c.bf16 %v815, %v814
      %v841 = vpack.c.bf16 %v817, %v816
      %v842 = vpack.c.bf16 %v819, %v818
      %v843 = vpack.c.bf16 %v821, %v820
      %v844 = vpack.c.bf16 %v823, %v822
      %v845 = vpack.c.bf16 %v825, %v824
      %v846 = vpack.c.bf16 %v827, %v826
      %v847 = vpack.c.bf16 %v829, %v828
      %v848 = vpack.c.bf16 %v831, %v830
      %v849 = vpack.c.bf16 %v833, %v832
      %v866 = vunpack.c.l.b16 %v834
      %v867 = vunpack.c.h.b16 %v834
      %v868 = vunpack.c.l.b16 %v835
      %v869 = vunpack.c.h.b16 %v835
      %v870 = vunpack.c.l.b16 %v836
      %v871 = vunpack.c.h.b16 %v836
      %v872 = vunpack.c.l.b16 %v837
      %v873 = vunpack.c.h.b16 %v837
      %v874 = vunpack.c.l.b16 %v838
      %v875 = vunpack.c.h.b16 %v838
      %v876 = vunpack.c.l.b16 %v839
      %v877 = vunpack.c.h.b16 %v839
      %v878 = vunpack.c.l.b16 %v840
      %v879 = vunpack.c.h.b16 %v840
      %v880 = vunpack.c.l.b16 %v841
      %v881 = vunpack.c.h.b16 %v841
      %v882 = vunpack.c.l.b16 %v842
      %v883 = vunpack.c.h.b16 %v842
      %v884 = vunpack.c.l.b16 %v843
      %v885 = vunpack.c.h.b16 %v843
      %v886 = vunpack.c.l.b16 %v844
      %v887 = vunpack.c.h.b16 %v844
      %v888 = vunpack.c.l.b16 %v845
      %v889 = vunpack.c.h.b16 %v845
      %v890 = vunpack.c.l.b16 %v846
      %v891 = vunpack.c.h.b16 %v846
      %v892 = vunpack.c.l.b16 %v847
      %v893 = vunpack.c.h.b16 %v847
      %v894 = vunpack.c.l.b16 %v848
      %v895 = vunpack.c.h.b16 %v848
      %v896 = vunpack.c.l.b16 %v849
      %v897 = vunpack.c.h.b16 %v849
      %v898 = vpack.c.b16 %v866, %v866
      %v899 = vpack.c.b16 %v867, %v867
      %v900 = vpack.c.b16 %v868, %v868
      %v901 = vpack.c.b16 %v869, %v869
      %v902 = vpack.c.b16 %v870, %v870
      %v903 = vpack.c.b16 %v871, %v871
      %v904 = vpack.c.b16 %v872, %v872
      %v905 = vpack.c.b16 %v873, %v873
      %v906 = vpack.c.b16 %v874, %v874
      %v907 = vpack.c.b16 %v875, %v875
      %v908 = vpack.c.b16 %v876, %v876
      %v909 = vpack.c.b16 %v877, %v877
      %v910 = vpack.c.b16 %v878, %v878
      %v911 = vpack.c.b16 %v879, %v879
      %v912 = vpack.c.b16 %v880, %v880
      %v913 = vpack.c.b16 %v881, %v881
      %v914 = vpack.c.b16 %v882, %v882
      %v915 = vpack.c.b16 %v883, %v883
      %v916 = vpack.c.b16 %v884, %v884
      %v917 = vpack.c.b16 %v885, %v885
      %v918 = vpack.c.b16 %v886, %v886
      %v919 = vpack.c.b16 %v887, %v887
      %v920 = vpack.c.b16 %v888, %v888
      %v921 = vpack.c.b16 %v889, %v889
      %v922 = vpack.c.b16 %v890, %v890
      %v923 = vpack.c.b16 %v891, %v891
      %v924 = vpack.c.b16 %v892, %v892
      %v925 = vpack.c.b16 %v893, %v893
      %v926 = vpack.c.b16 %v894, %v894
      %v927 = vpack.c.b16 %v895, %v895
      %v928 = vpack.c.b16 %v896, %v896
      %v929 = vpack.c.b16 %v897, %v897
      %962 = vst [vmem:[%s172] sm:$0xf] %v898
      %963 = vst [vmem:[%s172 + $0x4] sm:$0xf] %v899
      %964 = vst [vmem:[%s172 + $0x8] sm:$0xf] %v900
      %965 = vst [vmem:[%s172 + $0xc] sm:$0xf] %v901
      %966 = vst [vmem:[%s172 + $0x10] sm:$0xf] %v902
      %967 = vst [vmem:[%s172 + $0x14] sm:$0xf] %v903
      %968 = vst [vmem:[%s172 + $0x18] sm:$0xf] %v904
      %969 = vst [vmem:[%s172 + $0x1c] sm:$0xf] %v905
      %970 = vst [vmem:[%s172 + $0x20] sm:$0xf] %v906
      %971 = vst [vmem:[%s172 + $0x24] sm:$0xf] %v907
      %972 = vst [vmem:[%s172 + $0x28] sm:$0xf] %v908
      %973 = vst [vmem:[%s172 + $0x2c] sm:$0xf] %v909
      %974 = vst [vmem:[%s172 + $0x30] sm:$0xf] %v910
      %975 = vst [vmem:[%s172 + $0x34] sm:$0xf] %v911
      %976 = vst [vmem:[%s172 + $0x38] sm:$0xf] %v912
      %977 = vst [vmem:[%s172 + $0x3c] sm:$0xf] %v913
      %978 = vst [vmem:[%s172 + $0x40] sm:$0xf] %v914
      %979 = vst [vmem:[%s172 + $0x44] sm:$0xf] %v915
      %980 = vst [vmem:[%s172 + $0x48] sm:$0xf] %v916
      %981 = vst [vmem:[%s172 + $0x4c] sm:$0xf] %v917
      %982 = vst [vmem:[%s172 + $0x50] sm:$0xf] %v918
      %983 = vst [vmem:[%s172 + $0x54] sm:$0xf] %v919
      %984 = vst [vmem:[%s172 + $0x58] sm:$0xf] %v920
      %985 = vst [vmem:[%s172 + $0x5c] sm:$0xf] %v921
      %986 = vst [vmem:[%s172 + $0x60] sm:$0xf] %v922
      %987 = vst [vmem:[%s172 + $0x64] sm:$0xf] %v923
      %988 = vst [vmem:[%s172 + $0x68] sm:$0xf] %v924
      %989 = vst [vmem:[%s172 + $0x6c] sm:$0xf] %v925
      %990 = vst [vmem:[%s172 + $0x70] sm:$0xf] %v926
      %991 = vst [vmem:[%s172 + $0x74] sm:$0xf] %v927
      %992 = vst [vmem:[%s172 + $0x78] sm:$0xf] %v928
      %993 = vst [vmem:[%s172 + $0x7c] sm:$0xf] %v929
      %s994 = smul.u32 32, %s14
      %p995 = scmp.lt.s32.totalorder %s994, 127
      %s996 = scalar_select %p995, %s994, 127
      %s997 = smul.addr %s996, 4
      %s998 = scalar_lea.vmem %s3, %s997
      // Predicated region
      $region33: #{videogpt_ft_forward.4} parent=31 // pred_check
        %p999 = pneg %p100
      $region34: #{videogpt_ft_forward.4} parent=31 // pred_check_branch
        %1001 = sbr.rel (%p999) target = $region36
      $region35: #{videogpt_ft_forward.4} parent=31 // pred_region
        %s1002 = smul.u32 32, %s14
      $region36: #{videogpt_ft_forward.4} parent=31 // pred_fallthru
        _
    $region32: #{videogpt_ft_forward.4} parent=5 // pred_fallthru
      _
    %p1003 = scmp.le.s32.totalorder 2, %s9
    // Predicated region
    $region37: #{videogpt_ft_forward.4} parent=5 // pred_check
      %p1004 = pneg %p1003
    $region38: #{videogpt_ft_forward.4} parent=5 // pred_check_branch
      %1006 = sbr.rel (%p1004) target = $region40
    $region39: #{videogpt_ft_forward.4} parent=5 // pred_region
      %s1007 = ssub.s32 %s9, 2
      // Predicated region
      $region41: #{videogpt_ft_forward.4} parent=39 // pred_check
        %p1008 = pneg %p106
      $region42: #{videogpt_ft_forward.4} parent=39 // pred_check_branch
        %1010 = sbr.rel (%p1008) target = $region44
      $region43: #{videogpt_ft_forward.4} parent=39 // pred_region
        %s1011 = smul.u32 32, %s15
        %p1012 = scmp.lt.s32.totalorder %s1011, 127
        %s1013 = scalar_select %p1012, %s1011, 127
        %s1014 = smul.addr %s1013, 4
        %s1015 = scalar_lea.vmem %s3, %s1014
      $region44: #{videogpt_ft_forward.4} parent=39 // pred_fallthru
        _
    $region40: #{videogpt_ft_forward.4} parent=5 // pred_fallthru
      _
  $region6: #{videogpt_ft_forward.4} parent=0 // loop_footer
    %s13 = sadd.s32 1, %s9
  $region7: #{videogpt_ft_forward.4} parent=0 // loop_footer_branch
    %8 = sbr.rel target = $region3
  $region8: #{videogpt_ft_forward.4} parent=0 // loop_exit
    _

// kernel: videogpt_ft_forward.5
$region0: #{videogpt_ft_forward.5}
  #allocation0 [shape = 'u32[]', space=smem, size = 0x4, offset = 0x4, fixed_abs, tag = 'smem constant byte address 0x4 - core index']
  #allocation1 [shape = 'u32[144,128]{1,0:T(1,128)}', space=vmem, size = 0x12000, scoped, tag = 'internal scratch']
  %s0 = inlined_call_operand.vmem [shape: bf16[512,256], index: 0, kind: input, shape index: {}]
  %s1 = inlined_call_operand.vmem [shape: bf16[128,480], index: 1, kind: input, shape index: {}]
  %s2 = inlined_call_operand.vmem [shape: bf16[2,256,128], index: 2, kind: input, shape index: {}]
  %s3 = inlined_call_operand.vmem [shape: f32[2,512,480], index: 3, kind: output, shape index: {}]
  %s4 = sld [smem:[#allocation0]]
  $region45: #{videogpt_ft_forward.5} parent=0
    _
  %s6 = ssub.s32 1, %s4
  %s7 = scalar_select 0, %s6, %s4
  loop: start=0, step=1, limit=10
  $region2: #{videogpt_ft_forward.5} parent=0 // loop_pre_header
    _
  $region3: #{videogpt_ft_forward.5} parent=0 // loop_header
    %s9 = sphi 0, %s13
    %p10 = scmp.ge.s32.totalorder %s9, 10
    %s16 = sphi 0, %s28
    %s17 = sphi 0, %s24
    %s18 = sphi 0, %s16
    %s19 = sphi 0, %s17
    %s20 = sphi 0, %s18
    %s21 = sphi 0, %s19
    %s31 = sphi 0, %s33
    %s34 = sphi 0, %s31
    %s35 = sphi 0, %s34
    %s51 = sphi 0, %s35
    %s55 = sphi 0, %s55
    %s57 = sphi 0, %s55
    %s58 = sphi 0, %s57
    %s72 = sphi 0, %s58
    %s78 = sphi 0, %s80
    %s81 = sphi 0, %s78
    %s82 = sphi 0, %s81
    %s98 = sphi 0, %s82
    %s106 = sphi 0, %s108
    %s109 = sphi 0, %s106
    %s110 = sphi 0, %s109
    %s126 = sphi 0, %s110
  $region4: #{videogpt_ft_forward.5} parent=0 // loop_header_branch
    %12 = sbr.rel (%p10) target = $region8
  $region5: #{videogpt_ft_forward.5} parent=0 // loop_body
    %s14 = ssub.s32 %s9, 1
    %s15 = ssub.s32 %s9, 2
    %s22 = sadd.s32 1, %s17
    %p23 = scmp.ge.s32.totalorder %s22, 4
    %s24 = scalar_select %p23, 0, %s22
    %s25 = sadd.s32 1, %s16
    %s26 = scalar_select %p23, %s25, %s16
    %p27 = scmp.ge.s32.totalorder %s26, 2
    %s28 = scalar_select %p27, 0, %s26
    %s29 = ssub.s32 %s17, %s24
    %p30 = scmp.eq.s32.totalorder %s29, 0
    %s32 = sadd.s32 %s31, 1
    %s33 = scalar_select %p30, %s31, %s32
    %p36 = pneg %p30
    %p37 = scmp.eq.s32.totalorder %s9, 7
    %p38 = por %p36, %p37
    %p39 = scmp.ne.s32.totalorder %s31, %s34
    %p40 = scmp.eq.s32.totalorder %s9, 0
    %p41 = por %p39, %p40
    %p42 = scmp.ne.s32.totalorder %s31, %s34
    %p43 = scmp.eq.s32.totalorder %s14, 7
    %p44 = por %p42, %p43
    %p45 = scmp.ne.s32.totalorder %s34, %s35
    %p46 = scmp.eq.s32.totalorder %s14, 0
    %p47 = por %p45, %p46
    %p48 = scmp.ne.s32.totalorder %s34, %s35
    %p49 = scmp.eq.s32.totalorder %s15, 7
    %p50 = por %p48, %p49
    %p52 = scmp.ne.s32.totalorder %s35, %s51
    %p53 = scmp.eq.s32.totalorder %s15, 0
    %p54 = por %p52, %p53
    %s56 = sadd.s32 %s55, 1
    %p59 = scmp.eq.s32.totalorder %s9, 7
    %p60 = scmp.ne.s32.totalorder %s55, %s57
    %p61 = scmp.eq.s32.totalorder %s9, 0
    %p62 = por %p60, %p61
    %p63 = scmp.ne.s32.totalorder %s55, %s57
    %p64 = scmp.eq.s32.totalorder %s14, 7
    %p65 = por %p63, %p64
    %p66 = scmp.ne.s32.totalorder %s57, %s58
    %p67 = scmp.eq.s32.totalorder %s14, 0
    %p68 = por %p66, %p67
    %p69 = scmp.ne.s32.totalorder %s57, %s58
    %p70 = scmp.eq.s32.totalorder %s15, 7
    %p71 = por %p69, %p70
    %p73 = scmp.ne.s32.totalorder %s58, %s72
    %p74 = scmp.eq.s32.totalorder %s15, 0
    %p75 = por %p73, %p74
    %s76 = ssub.s32 %s16, %s28
    %p77 = scmp.eq.s32.totalorder %s76, 0
    %s79 = sadd.s32 %s78, 1
    %s80 = scalar_select %p77, %s78, %s79
    %p83 = pneg %p77
    %p84 = scmp.eq.s32.totalorder %s9, 7
    %p85 = por %p83, %p84
    %p86 = scmp.ne.s32.totalorder %s78, %s81
    %p87 = scmp.eq.s32.totalorder %s9, 0
    %p88 = por %p86, %p87
    %p89 = scmp.ne.s32.totalorder %s78, %s81
    %p90 = scmp.eq.s32.totalorder %s14, 7
    %p91 = por %p89, %p90
    %p92 = scmp.ne.s32.totalorder %s81, %s82
    %p93 = scmp.eq.s32.totalorder %s14, 0
    %p94 = por %p92, %p93
    %p95 = scmp.ne.s32.totalorder %s81, %s82
    %p96 = scmp.eq.s32.totalorder %s15, 7
    %p97 = por %p95, %p96
    %p99 = scmp.ne.s32.totalorder %s82, %s98
    %p100 = scmp.eq.s32.totalorder %s15, 0
    %p101 = por %p99, %p100
    %s102 = ssub.s32 %s16, %s28
    %s103 = ssub.s32 %s17, %s24
    %s104 = sor.u32 %s102, %s103
    %p105 = scmp.eq.s32.totalorder %s104, 0
    %s107 = sadd.s32 %s106, 1
    %s108 = scalar_select %p105, %s106, %s107
    %p111 = pneg %p105
    %p112 = scmp.eq.s32.totalorder %s9, 7
    %p113 = por %p111, %p112
    %p114 = scmp.ne.s32.totalorder %s106, %s109
    %p115 = scmp.eq.s32.totalorder %s9, 0
    %p116 = por %p114, %p115
    %p117 = scmp.ne.s32.totalorder %s106, %s109
    %p118 = scmp.eq.s32.totalorder %s14, 7
    %p119 = por %p117, %p118
    %p120 = scmp.ne.s32.totalorder %s109, %s110
    %p121 = scmp.eq.s32.totalorder %s14, 0
    %p122 = por %p120, %p121
    %p123 = scmp.ne.s32.totalorder %s109, %s110
    %p124 = scmp.eq.s32.totalorder %s15, 7
    %p125 = por %p123, %p124
    %p127 = scmp.ne.s32.totalorder %s110, %s126
    %p128 = scmp.eq.s32.totalorder %s15, 0
    %p129 = por %p127, %p128
    %p130 = scmp.le.s32.totalorder 1, %s9
    %p131 = scmp.lt.s32.totalorder %s9, 9
    %p132 = pnand %p130, %p131
    %p133 = pneg %p132
    // Predicated region
    $region9: #{videogpt_ft_forward.5} parent=5 // pred_check
      _
    $region10: #{videogpt_ft_forward.5} parent=5 // pred_check_branch
      %135 = sbr.rel (%p132) target = $region12
    $region11: #{videogpt_ft_forward.5} parent=5 // pred_region
      %s136 = ssub.s32 %s9, 1
      // Predicated region
      $region13: #{videogpt_ft_forward.5} parent=11 // pred_check
        %p137 = pneg %p68
      $region14: #{videogpt_ft_forward.5} parent=11 // pred_check_branch
        %139 = sbr.rel (%p137) target = $region16
      $region15: #{videogpt_ft_forward.5} parent=11 // pred_region
        _
      $region16: #{videogpt_ft_forward.5} parent=11 // pred_fallthru
        _
    $region12: #{videogpt_ft_forward.5} parent=5 // pred_fallthru
      _
    %p140 = scmp.lt.s32.totalorder %s9, 8
    // Predicated region
    $region17: #{videogpt_ft_forward.5} parent=5 // pred_check
      %p141 = pneg %p140
    $region18: #{videogpt_ft_forward.5} parent=5 // pred_check_branch
      %143 = sbr.rel (%p141) target = $region20
    $region19: #{videogpt_ft_forward.5} parent=5 // pred_region
      // Predicated region
      $region21: #{videogpt_ft_forward.5} parent=19 // pred_check
        %p144 = pneg %p41
      $region22: #{videogpt_ft_forward.5} parent=19 // pred_check_branch
        %146 = sbr.rel (%p144) target = $region24
      $region23: #{videogpt_ft_forward.5} parent=19 // pred_region
        %s147 = smul.u32 16, %s17
        %p148 = scmp.lt.s32.totalorder %s147, 63
        %s149 = scalar_select %p148, %s147, 63
        %s150 = smul.addr %s149, 2
        %s151 = smul.addr %s150, 4
        %s152 = scalar_lea.vmem %s0, %s151
        %s153 = smul.u32 16, %s17
      $region24: #{videogpt_ft_forward.5} parent=19 // pred_fallthru
        _
      // Predicated region
      $region25: #{videogpt_ft_forward.5} parent=19 // pred_check
        %p154 = pneg %p88
      $region26: #{videogpt_ft_forward.5} parent=19 // pred_check_branch
        %156 = sbr.rel (%p154) target = $region28
      $region27: #{videogpt_ft_forward.5} parent=19 // pred_region
        %p157 = scmp.lt.s32.totalorder %s16, 1
        %s158 = scalar_select %p157, %s16, 1
        %s159 = smul.addr %s158, 32
        %s160 = smul.addr %s159, 4
        %s161 = scalar_lea.vmem %s2, %s160
      $region28: #{videogpt_ft_forward.5} parent=19 // pred_fallthru
        _
    $region20: #{videogpt_ft_forward.5} parent=5 // pred_fallthru
      _
    %p162 = scmp.le.s32.totalorder 1, %s9
    %p163 = scmp.lt.s32.totalorder %s9, 9
    %p164 = pnand %p162, %p163
    %p165 = pneg %p164
    // Predicated region
    $region29: #{videogpt_ft_forward.5} parent=5 // pred_check
      _
    $region30: #{videogpt_ft_forward.5} parent=5 // pred_check_branch
      %167 = sbr.rel (%p164) target = $region32
    $region31: #{videogpt_ft_forward.5} parent=5 // pred_region
      %s168 = ssub.s32 %s9, 1
      %s169 = smul.u32 16, %s19
      %p170 = scmp.lt.s32.totalorder %s169, 63
      %s171 = scalar_select %p170, %s169, 63
      %s172 = smul.addr %s171, 2
      %s173 = smul.addr %s172, 4
      %s174 = scalar_lea.vmem %s0, %s173
      %p175 = pneg %p47
      %p176 = pneg %p44
      %p177 = pneg %p68
      %p178 = pneg %p65
      %p179 = scmp.lt.s32.totalorder %s18, 1
      %s180 = scalar_select %p179, %s18, 1
      %s181 = smul.addr %s180, 32
      %s182 = smul.addr %s181, 4
      %s183 = scalar_lea.vmem %s2, %s182
      %p184 = pneg %p94
      %p185 = pneg %p91
      %p186 = pneg %p122
      %p187 = pneg %p119
      %s188 = smul.u32 16, %s19
      %p189 = scmp.lt.s32.totalorder %s18, 1
      %s190 = scalar_select %p189, %s18, 1
      %p191 = scmp.lt.s32.totalorder %s188, 63
      %s192 = scalar_select %p191, %s188, 63
      %s193 = smul.addr %s192, 4
      %s194 = smul.addr %s190, 256
      %s195 = sadd.s32 %s193, %s194
      %s196 = smul.addr %s195, 8
      %s197 = scalar_lea.vmem %s3, %s196
      %s198 = smul.u32 16, %s19
      %p199 = scmp.lt.s32.totalorder %s198, 63
      %s200 = scalar_select %p199, %s198, 63
      %s201 = smul.addr %s200, 2
      %s202 = smul.addr %s201, 4
      %s203 = scalar_lea.vmem %s0, %s202
      %s204 = smul.u32 16, %s19
      %p205 = scmp.lt.s32.totalorder %s18, 1
      %s206 = scalar_select %p205, %s18, 1
      %s207 = smul.addr %s206, 32
      %s208 = smul.addr %s207, 4
      %s209 = scalar_lea.vmem %s2, %s208
      %s210 = smul.u32 16, %s19
      %p211 = scmp.lt.s32.totalorder %s18, 1
      %s212 = scalar_select %p211, %s18, 1
      %p213 = scmp.lt.s32.totalorder %s210, 63
      %s214 = scalar_select %p213, %s210, 63
      %s215 = smul.addr %s214, 4
      %s216 = smul.addr %s212, 256
      %s217 = sadd.s32 %s215, %s216
      %s218 = smul.addr %s217, 8
      %s219 = scalar_lea.vmem %s3, %s218
      %s220 = smul.u32 16, %s19
      %v222 = vld [vmem:[%s203] sm:$0xff]
      %v223 = vld [vmem:[%s203 + $0x8] sm:$0xff]
      %v224 = vld [vmem:[%s203 + $0x10] sm:$0xff]
      %v225 = vld [vmem:[%s203 + $0x18] sm:$0xff]
      %v226 = vld [vmem:[%s203 + $0x20] sm:$0xff]
      %v227 = vld [vmem:[%s203 + $0x28] sm:$0xff]
      %v228 = vld [vmem:[%s203 + $0x30] sm:$0xff]
      %v229 = vld [vmem:[%s203 + $0x38] sm:$0xff]
      %v230 = vld [vmem:[%s203 + $0x40] sm:$0xff]
      %v231 = vld [vmem:[%s203 + $0x48] sm:$0xff]
      %v232 = vld [vmem:[%s203 + $0x50] sm:$0xff]
      %v233 = vld [vmem:[%s203 + $0x58] sm:$0xff]
      %v234 = vld [vmem:[%s203 + $0x60] sm:$0xff]
      %v235 = vld [vmem:[%s203 + $0x68] sm:$0xff]
      %v236 = vld [vmem:[%s203 + $0x70] sm:$0xff]
      %v237 = vld [vmem:[%s203 + $0x78] sm:$0xff]
      %v238 = vld [vmem:[%s209] sm:$0xf]
      %v239 = vld [vmem:[%s209 + $0x4] sm:$0xf]
      %v240 = vld [vmem:[%s209 + $0x8] sm:$0xf]
      %v241 = vld [vmem:[%s209 + $0xc] sm:$0xf]
      %v242 = vld [vmem:[%s209 + $0x10] sm:$0xf]
      %v243 = vld [vmem:[%s209 + $0x14] sm:$0xf]
      %v244 = vld [vmem:[%s209 + $0x18] sm:$0xf]
      %v245 = vld [vmem:[%s209 + $0x1c] sm:$0xf]
      %v246 = vld [vmem:[%s209 + $0x20] sm:$0xf]
      %v247 = vld [vmem:[%s209 + $0x24] sm:$0xf]
      %v248 = vld [vmem:[%s209 + $0x28] sm:$0xf]
      %v249 = vld [vmem:[%s209 + $0x2c] sm:$0xf]
      %v250 = vld [vmem:[%s209 + $0x30] sm:$0xf]
      %v251 = vld [vmem:[%s209 + $0x34] sm:$0xf]
      %v252 = vld [vmem:[%s209 + $0x38] sm:$0xf]
      %v253 = vld [vmem:[%s209 + $0x3c] sm:$0xf]
      %v254 = vld [vmem:[%s209 + $0x40] sm:$0xf]
      %v255 = vld [vmem:[%s209 + $0x44] sm:$0xf]
      %v256 = vld [vmem:[%s209 + $0x48] sm:$0xf]
      %v257 = vld [vmem:[%s209 + $0x4c] sm:$0xf]
      %v258 = vld [vmem:[%s209 + $0x50] sm:$0xf]
      %v259 = vld [vmem:[%s209 + $0x54] sm:$0xf]
      %v260 = vld [vmem:[%s209 + $0x58] sm:$0xf]
      %v261 = vld [vmem:[%s209 + $0x5c] sm:$0xf]
      %v262 = vld [vmem:[%s209 + $0x60] sm:$0xf]
      %v263 = vld [vmem:[%s209 + $0x64] sm:$0xf]
      %v264 = vld [vmem:[%s209 + $0x68] sm:$0xf]
      %v265 = vld [vmem:[%s209 + $0x6c] sm:$0xf]
      %v266 = vld [vmem:[%s209 + $0x70] sm:$0xf]
      %v267 = vld [vmem:[%s209 + $0x74] sm:$0xf]
      %v268 = vld [vmem:[%s209 + $0x78] sm:$0xf]
      %v269 = vld [vmem:[%s209 + $0x7c] sm:$0xf]
      %v286 = vunpack.c.l.b16 %v222
      %v287 = vunpack.c.h.b16 %v222
      %v288 = vunpack.c.l.b16 %v223
      %v289 = vunpack.c.h.b16 %v223
      %v290 = vunpack.c.l.b16 %v224
      %v291 = vunpack.c.h.b16 %v224
      %v292 = vunpack.c.l.b16 %v225
      %v293 = vunpack.c.h.b16 %v225
      %v294 = vunpack.c.l.b16 %v226
      %v295 = vunpack.c.h.b16 %v226
      %v296 = vunpack.c.l.b16 %v227
      %v297 = vunpack.c.h.b16 %v227
      %v298 = vunpack.c.l.b16 %v228
      %v299 = vunpack.c.h.b16 %v228
      %v300 = vunpack.c.l.b16 %v229
      %v301 = vunpack.c.h.b16 %v229
      %v302 = vunpack.c.l.b16 %v230
      %v303 = vunpack.c.h.b16 %v230
      %v304 = vunpack.c.l.b16 %v231
      %v305 = vunpack.c.h.b16 %v231
      %v306 = vunpack.c.l.b16 %v232
      %v307 = vunpack.c.h.b16 %v232
      %v308 = vunpack.c.l.b16 %v233
      %v309 = vunpack.c.h.b16 %v233
      %v310 = vunpack.c.l.b16 %v234
      %v311 = vunpack.c.h.b16 %v234
      %v312 = vunpack.c.l.b16 %v235
      %v313 = vunpack.c.h.b16 %v235
      %v314 = vunpack.c.l.b16 %v236
      %v315 = vunpack.c.h.b16 %v236
      %v316 = vunpack.c.l.b16 %v237
      %v317 = vunpack.c.h.b16 %v237
      %v318 = vpack.c.b16 %v288, %v286
      %v319 = vpack.c.b16 %v289, %v287
      %v320 = vpack.c.b16 %v292, %v290
      %v321 = vpack.c.b16 %v293, %v291
      %v322 = vpack.c.b16 %v296, %v294
      %v323 = vpack.c.b16 %v297, %v295
      %v324 = vpack.c.b16 %v300, %v298
      %v325 = vpack.c.b16 %v301, %v299
      %v326 = vpack.c.b16 %v304, %v302
      %v327 = vpack.c.b16 %v305, %v303
      %v328 = vpack.c.b16 %v308, %v306
      %v329 = vpack.c.b16 %v309, %v307
      %v330 = vpack.c.b16 %v312, %v310
      %v331 = vpack.c.b16 %v313, %v311
      %v332 = vpack.c.b16 %v316, %v314
      %v333 = vpack.c.b16 %v317, %v315
      %v382 = vunpack.c.l.b16 %v238
      %v383 = vunpack.c.l.b16 %v239
      %v384 = vunpack.c.l.b16 %v240
      %v385 = vunpack.c.l.b16 %v241
      %v386 = vunpack.c.l.b16 %v242
      %v387 = vunpack.c.l.b16 %v243
      %v388 = vunpack.c.l.b16 %v244
      %v389 = vunpack.c.l.b16 %v245
      %v390 = vunpack.c.l.b16 %v246
      %v391 = vunpack.c.l.b16 %v247
      %v392 = vunpack.c.l.b16 %v248
      %v393 = vunpack.c.l.b16 %v249
      %v394 = vunpack.c.l.b16 %v250
      %v395 = vunpack.c.l.b16 %v251
      %v396 = vunpack.c.l.b16 %v252
      %v397 = vunpack.c.l.b16 %v253
      %v398 = vunpack.c.l.b16 %v254
      %v399 = vunpack.c.l.b16 %v255
      %v400 = vunpack.c.l.b16 %v256
      %v401 = vunpack.c.l.b16 %v257
      %v402 = vunpack.c.l.b16 %v258
      %v403 = vunpack.c.l.b16 %v259
      %v404 = vunpack.c.l.b16 %v260
      %v405 = vunpack.c.l.b16 %v261
      %v406 = vunpack.c.l.b16 %v262
      %v407 = vunpack.c.l.b16 %v263
      %v408 = vunpack.c.l.b16 %v264
      %v409 = vunpack.c.l.b16 %v265
      %v410 = vunpack.c.l.b16 %v266
      %v411 = vunpack.c.l.b16 %v267
      %v412 = vunpack.c.l.b16 %v268
      %v413 = vunpack.c.l.b16 %v269
      %v414 = vpack.c.b16 %v383, %v382
      %v415 = vpack.c.b16 %v385, %v384
      %v416 = vpack.c.b16 %v387, %v386
      %v417 = vpack.c.b16 %v389, %v388
      %v418 = vpack.c.b16 %v391, %v390
      %v419 = vpack.c.b16 %v393, %v392
      %v420 = vpack.c.b16 %v395, %v394
      %v421 = vpack.c.b16 %v397, %v396
      %v422 = vpack.c.b16 %v399, %v398
      %v423 = vpack.c.b16 %v401, %v400
      %v424 = vpack.c.b16 %v403, %v402
      %v425 = vpack.c.b16 %v405, %v404
      %v426 = vpack.c.b16 %v407, %v406
      %v427 = vpack.c.b16 %v409, %v408
      %v428 = vpack.c.b16 %v411, %v410
      %v429 = vpack.c.b16 %v413, %v412
      %446 = vmatprep.subr.bf16.mxu0 0
      %447 = vmatpush1.bf16.msra.mxu0 %v414
      %448 = vmatprep.subr.bf16.mxu0 0
      %449 = vmatpush1.bf16.msra.mxu0 %v415
      %450 = vmatprep.subr.bf16.mxu0 0
      %451 = vmatpush1.bf16.msra.mxu0 %v416
      %452 = vmatprep.subr.bf16.mxu0 0
      %453 = vmatpush1.bf16.msra.mxu0 %v417
      %454 = vmatprep.subr.bf16.mxu0 0
      %455 = vmatpush1.bf16.msra.mxu0 %v418
      %456 = vmatprep.subr.bf16.mxu0 0
      %457 = vmatpush1.bf16.msra.mxu0 %v419
      %458 = vmatprep.subr.bf16.mxu0 0
      %459 = vmatpush1.bf16.msra.mxu0 %v420
      %460 = vmatprep.subr.bf16.mxu0 0
      %461 = vmatpush1.bf16.msra.mxu0 %v421
      %462 = vmatprep.subr.bf16.mxu0 0
      %463 = vmatpush1.bf16.msra.mxu0 %v422
      %464 = vmatprep.subr.bf16.mxu0 0
      %465 = vmatpush1.bf16.msra.mxu0 %v423
      %466 = vmatprep.subr.bf16.mxu0 0
      %467 = vmatpush1.bf16.msra.mxu0 %v424
      %468 = vmatprep.subr.bf16.mxu0 0
      %469 = vmatpush1.bf16.msra.mxu0 %v425
      %470 = vmatprep.subr.bf16.mxu0 0
      %471 = vmatpush1.bf16.msra.mxu0 %v426
      %472 = vmatprep.subr.bf16.mxu0 0
      %473 = vmatpush1.bf16.msra.mxu0 %v427
      %474 = vmatprep.subr.bf16.mxu0 0
      %475 = vmatpush1.bf16.msra.mxu0 %v428
      %476 = vmatprep.subr.bf16.mxu0 0
      %477 = vmatpush1.bf16.msra.mxu0 %v429
      %478 = vmatprep.mubr.bf16.mxu0 %v319
      %479 = vmatmul.mubr.bf16.gmra.mrb[0].mxu0 %v318
      %v480 = vpop.f32.mrb[0].mxu0
      %v481 = vadd.f32 0.0, %v480
      %v482 = vpop.f32.mrb[0].mxu0
      %v483 = vpop.f32.mrb[0].mxu0
      %v484 = vadd.f32 0.0, %v483
      %v485 = vpop.f32.mrb[0].mxu0
      %486 = vmatprep.mubr.bf16.mxu0 %v321
      %487 = vmatmul.mubr.bf16.gmra.mrb[0].mxu0 %v320
      %v488 = vpop.f32.mrb[0].mxu0
      %v489 = vadd.f32 0.0, %v488
      %v490 = vpop.f32.mrb[0].mxu0
      %v491 = vpop.f32.mrb[0].mxu0
      %v492 = vadd.f32 0.0, %v491
      %v493 = vpop.f32.mrb[0].mxu0
      %494 = vmatprep.mubr.bf16.mxu0 %v323
      %495 = vmatmul.mubr.bf16.gmra.mrb[0].mxu0 %v322
      %v496 = vpop.f32.mrb[0].mxu0
      %v497 = vadd.f32 0.0, %v496
      %v498 = vpop.f32.mrb[0].mxu0
      %v499 = vpop.f32.mrb[0].mxu0
      %v500 = vadd.f32 0.0, %v499
      %v501 = vpop.f32.mrb[0].mxu0
      %502 = vmatprep.mubr.bf16.mxu0 %v325
      %503 = vmatmul.mubr.bf16.gmra.mrb[0].mxu0 %v324
      %v504 = vpop.f32.mrb[0].mxu0
      %v505 = vadd.f32 0.0, %v504
      %v506 = vpop.f32.mrb[0].mxu0
      %v507 = vpop.f32.mrb[0].mxu0
      %v508 = vadd.f32 0.0, %v507
      %v509 = vpop.f32.mrb[0].mxu0
      %510 = vmatprep.mubr.bf16.mxu0 %v327
      %511 = vmatmul.mubr.bf16.gmra.mrb[0].mxu0 %v326
      %v512 = vpop.f32.mrb[0].mxu0
      %v513 = vadd.f32 0.0, %v512
      %v514 = vpop.f32.mrb[0].mxu0
      %v515 = vpop.f32.mrb[0].mxu0
      %v516 = vadd.f32 0.0, %v515
      %v517 = vpop.f32.mrb[0].mxu0
      %518 = vmatprep.mubr.bf16.mxu0 %v329
      %519 = vmatmul.mubr.bf16.gmra.mrb[0].mxu0 %v328
      %v520 = vpop.f32.mrb[0].mxu0
      %v521 = vadd.f32 0.0, %v520
      %v522 = vpop.f32.mrb[0].mxu0
      %v523 = vpop.f32.mrb[0].mxu0
      %v524 = vadd.f32 0.0, %v523
      %v525 = vpop.f32.mrb[0].mxu0
      %526 = vmatprep.mubr.bf16.mxu0 %v331
      %527 = vmatmul.mubr.bf16.gmra.mrb[0].mxu0 %v330
      %v528 = vpop.f32.mrb[0].mxu0
      %v529 = vadd.f32 0.0, %v528
      %v530 = vpop.f32.mrb[0].mxu0
      %v531 = vpop.f32.mrb[0].mxu0
      %v532 = vadd.f32 0.0, %v531
      %v533 = vpop.f32.mrb[0].mxu0
      %534 = vmatprep.mubr.bf16.mxu0 %v333
      %535 = vmatmul.mubr.bf16.gmra.mrb[0].mxu0 %v332
      %v536 = vpop.f32.mrb[0].mxu0
      %v537 = vadd.f32 0.0, %v536
      %v538 = vpop.f32.mrb[0].mxu0
      %v539 = vpop.f32.mrb[0].mxu0
      %v540 = vadd.f32 0.0, %v539
      %v541 = vpop.f32.mrb[0].mxu0
      %542 = vdwg.mxu0
      %v543 = vpack.c.bf16 %v484, %v481
      %v544 = vpack.c.bf16 %v492, %v489
      %v545 = vpack.c.bf16 %v500, %v497
      %v546 = vpack.c.bf16 %v508, %v505
      %v547 = vpack.c.bf16 %v516, %v513
      %v548 = vpack.c.bf16 %v524, %v521
      %v549 = vpack.c.bf16 %v532, %v529
      %v550 = vpack.c.bf16 %v540, %v537
      %v551 = vld [vmem:[%s1] sm:$0xff]
      %v552 = vld [vmem:[%s1 + $0x8] sm:$0xff]
      %v553 = vld [vmem:[%s1 + $0x10] sm:$0xff]
      %v554 = vld [vmem:[%s1 + $0x18] sm:$0xff]
      %v555 = vld [vmem:[%s1 + $0x20] sm:$0xff]
      %v556 = vld [vmem:[%s1 + $0x28] sm:$0xff]
      %v557 = vld [vmem:[%s1 + $0x30] sm:$0xff]
      %v558 = vld [vmem:[%s1 + $0x38] sm:$0xff]
      %v559 = vld [vmem:[%s1 + $0x40] sm:$0xff]
      %v560 = vld [vmem:[%s1 + $0x48] sm:$0xff]
      %v561 = vld [vmem:[%s1 + $0x50] sm:$0xff]
      %v562 = vld [vmem:[%s1 + $0x58] sm:$0xff]
      %v563 = vld [vmem:[%s1 + $0x60] sm:$0xff]
      %v564 = vld [vmem:[%s1 + $0x68] sm:$0xff]
      %v565 = vld [vmem:[%s1 + $0x70] sm:$0xff]
      %v566 = vld [vmem:[%s1 + $0x78] sm:$0xff]
      %v567 = vld [vmem:[%s1 + $0x80] sm:$0xff]
      %v568 = vld [vmem:[%s1 + $0x88] sm:$0xff]
      %v569 = vld [vmem:[%s1 + $0x90] sm:$0xff]
      %v570 = vld [vmem:[%s1 + $0x98] sm:$0xff]
      %v571 = vld [vmem:[%s1 + $0xa0] sm:$0xff]
      %v572 = vld [vmem:[%s1 + $0xa8] sm:$0xff]
      %v573 = vld [vmem:[%s1 + $0xb0] sm:$0xff]
      %v574 = vld [vmem:[%s1 + $0xb8] sm:$0xff]
      %v575 = vld [vmem:[%s1 + $0xc0] sm:$0xff]
      %v576 = vld [vmem:[%s1 + $0xc8] sm:$0xff]
      %v577 = vld [vmem:[%s1 + $0xd0] sm:$0xff]
      %v578 = vld [vmem:[%s1 + $0xd8] sm:$0xff]
      %v579 = vld [vmem:[%s1 + $0xe0] sm:$0xff]
      %v580 = vld [vmem:[%s1 + $0xe8] sm:$0xff]
      %v581 = vld [vmem:[%s1 + $0xf0] sm:$0xff]
      %v582 = vld [vmem:[%s1 + $0xf8] sm:$0xff]
      %v615 = vunpack.c.l.b16 %v551
      %v616 = vunpack.c.h.b16 %v551
      %v617 = vunpack.c.l.b16 %v552
      %v618 = vunpack.c.h.b16 %v552
      %v619 = vunpack.c.l.b16 %v553
      %v620 = vunpack.c.h.b16 %v553
      %v621 = vunpack.c.l.b16 %v554
      %v622 = vunpack.c.h.b16 %v554
      %v623 = vunpack.c.l.b16 %v555
      %v624 = vunpack.c.h.b16 %v555
      %v625 = vunpack.c.l.b16 %v556
      %v626 = vunpack.c.h.b16 %v556
      %v627 = vunpack.c.l.b16 %v557
      %v628 = vunpack.c.h.b16 %v557
      %v629 = vunpack.c.l.b16 %v558
      %v630 = vunpack.c.h.b16 %v558
      %v631 = vunpack.c.l.b16 %v559
      %v632 = vunpack.c.h.b16 %v559
      %v633 = vunpack.c.l.b16 %v560
      %v634 = vunpack.c.h.b16 %v560
      %v635 = vunpack.c.l.b16 %v561
      %v636 = vunpack.c.h.b16 %v561
      %v637 = vunpack.c.l.b16 %v562
      %v638 = vunpack.c.h.b16 %v562
      %v639 = vunpack.c.l.b16 %v563
      %v640 = vunpack.c.h.b16 %v563
      %v641 = vunpack.c.l.b16 %v564
      %v642 = vunpack.c.h.b16 %v564
      %v643 = vunpack.c.l.b16 %v565
      %v644 = vunpack.c.h.b16 %v565
      %v645 = vunpack.c.l.b16 %v566
      %v646 = vunpack.c.h.b16 %v566
      %v647 = vunpack.c.l.b16 %v567
      %v648 = vunpack.c.h.b16 %v567
      %v649 = vunpack.c.l.b16 %v568
      %v650 = vunpack.c.h.b16 %v568
      %v651 = vunpack.c.l.b16 %v569
      %v652 = vunpack.c.h.b16 %v569
      %v653 = vunpack.c.l.b16 %v570
      %v654 = vunpack.c.h.b16 %v570
      %v655 = vunpack.c.l.b16 %v571
      %v656 = vunpack.c.h.b16 %v571
      %v657 = vunpack.c.l.b16 %v572
      %v658 = vunpack.c.h.b16 %v572
      %v659 = vunpack.c.l.b16 %v573
      %v660 = vunpack.c.h.b16 %v573
      %v661 = vunpack.c.l.b16 %v574
      %v662 = vunpack.c.h.b16 %v574
      %v663 = vunpack.c.l.b16 %v575
      %v664 = vunpack.c.h.b16 %v575
      %v665 = vunpack.c.l.b16 %v576
      %v666 = vunpack.c.h.b16 %v576
      %v667 = vunpack.c.l.b16 %v577
      %v668 = vunpack.c.h.b16 %v577
      %v669 = vunpack.c.l.b16 %v578
      %v670 = vunpack.c.h.b16 %v578
      %v671 = vunpack.c.l.b16 %v579
      %v672 = vunpack.c.h.b16 %v579
      %v673 = vunpack.c.l.b16 %v580
      %v674 = vunpack.c.h.b16 %v580
      %v675 = vunpack.c.l.b16 %v581
      %v676 = vunpack.c.h.b16 %v581
      %v677 = vunpack.c.l.b16 %v582
      %v678 = vunpack.c.h.b16 %v582
      %v679 = vpack.c.b16 %v619, %v615
      %v680 = vpack.c.b16 %v620, %v616
      %v681 = vpack.c.b16 %v621, %v617
      %v682 = vpack.c.b16 %v622, %v618
      %v683 = vpack.c.b16 %v627, %v623
      %v684 = vpack.c.b16 %v628, %v624
      %v685 = vpack.c.b16 %v629, %v625
      %v686 = vpack.c.b16 %v630, %v626
      %v687 = vpack.c.b16 %v635, %v631
      %v688 = vpack.c.b16 %v636, %v632
      %v689 = vpack.c.b16 %v637, %v633
      %v690 = vpack.c.b16 %v638, %v634
      %v691 = vpack.c.b16 %v643, %v639
      %v692 = vpack.c.b16 %v644, %v640
      %v693 = vpack.c.b16 %v645, %v641
      %v694 = vpack.c.b16 %v646, %v642
      %v695 = vpack.c.b16 %v651, %v647
      %v696 = vpack.c.b16 %v652, %v648
      %v697 = vpack.c.b16 %v653, %v649
      %v698 = vpack.c.b16 %v654, %v650
      %v699 = vpack.c.b16 %v659, %v655
      %v700 = vpack.c.b16 %v660, %v656
      %v701 = vpack.c.b16 %v661, %v657
      %v702 = vpack.c.b16 %v662, %v658
      %v703 = vpack.c.b16 %v667, %v663
      %v704 = vpack.c.b16 %v668, %v664
      %v705 = vpack.c.b16 %v669, %v665
      %v706 = vpack.c.b16 %v670, %v666
      %v707 = vpack.c.b16 %v675, %v671
      %v708 = vpack.c.b16 %v676, %v672
      %v709 = vpack.c.b16 %v677, %v673
      %v710 = vpack.c.b16 %v678, %v674
      %743 = vmatprep.subr.bf16.mxu0 %v680
      %744 = vmatpush1.bf16.msra.mxu0 %v679
      %745 = vmatprep.subr.bf16.mxu0 %v684
      %746 = vmatpush1.bf16.msra.mxu0 %v683
      %747 = vmatprep.subr.bf16.mxu0 %v688
      %748 = vmatpush1.bf16.msra.mxu0 %v687
      %749 = vmatprep.subr.bf16.mxu0 %v692
      %750 = vmatpush1.bf16.msra.mxu0 %v691
      %751 = vmatprep.subr.bf16.mxu0 %v696
      %752 = vmatpush1.bf16.msra.mxu0 %v695
      %753 = vmatprep.subr.bf16.mxu0 %v700
      %754 = vmatpush1.bf16.msra.mxu0 %v699
      %755 = vmatprep.subr.bf16.mxu0 %v704
      %756 = vmatpush1.bf16.msra.mxu0 %v703
      %757 = vmatprep.subr.bf16.mxu0 %v708
      %758 = vmatpush1.bf16.msra.mxu0 %v707
      %759 = vmatprep.subr.bf16.mxu0 0
      %760 = vmatpush1.bf16.msra.mxu0 0
      %761 = vmatprep.subr.bf16.mxu0 0
      %762 = vmatpush1.bf16.msra.mxu0 0
      %763 = vmatprep.subr.bf16.mxu0 0
      %764 = vmatpush1.bf16.msra.mxu0 0
      %765 = vmatprep.subr.bf16.mxu0 0
      %766 = vmatpush1.bf16.msra.mxu0 0
      %767 = vmatprep.subr.bf16.mxu0 0
      %768 = vmatpush1.bf16.msra.mxu0 0
      %769 = vmatprep.subr.bf16.mxu0 0
      %770 = vmatpush1.bf16.msra.mxu0 0
      %771 = vmatprep.subr.bf16.mxu0 0
      %772 = vmatpush1.bf16.msra.mxu0 0
      %773 = vmatprep.subr.bf16.mxu0 0
      %774 = vmatpush1.bf16.msra.mxu0 0
      %775 = vmatprep.mubr.bf16.mxu0 0
      %776 = vmatmul.mubr.bf16.gmra.mrb[0].mxu0 %v543
      %v777 = vpop.f32.mrb[0].mxu0
      %v778 = vadd.f32 0.0, %v777
      %v779 = vpop.f32.mrb[0].mxu0
      %v780 = vadd.f32 0.0, %v779
      %v781 = vpop.f32.mrb[0].mxu0
      %v782 = vadd.f32 0.0, %v781
      %v783 = vpop.f32.mrb[0].mxu0
      %v784 = vadd.f32 0.0, %v783
      %785 = vmatprep.mubr.bf16.mxu0 0
      %786 = vmatmul.mubr.bf16.gmra.mrb[0].mxu0 %v544
      %v787 = vpop.f32.mrb[0].mxu0
      %v788 = vadd.f32 0.0, %v787
      %v789 = vpop.f32.mrb[0].mxu0
      %v790 = vadd.f32 0.0, %v789
      %v791 = vpop.f32.mrb[0].mxu0
      %v792 = vadd.f32 0.0, %v791
      %v793 = vpop.f32.mrb[0].mxu0
      %v794 = vadd.f32 0.0, %v793
      %795 = vmatprep.mubr.bf16.mxu0 0
      %796 = vmatmul.mubr.bf16.gmra.mrb[0].mxu0 %v545
      %v797 = vpop.f32.mrb[0].mxu0
      %v798 = vadd.f32 0.0, %v797
      %v799 = vpop.f32.mrb[0].mxu0
      %v800 = vadd.f32 0.0, %v799
      %v801 = vpop.f32.mrb[0].mxu0
      %v802 = vadd.f32 0.0, %v801
      %v803 = vpop.f32.mrb[0].mxu0
      %v804 = vadd.f32 0.0, %v803
      %805 = vmatprep.mubr.bf16.mxu0 0
      %806 = vmatmul.mubr.bf16.gmra.mrb[0].mxu0 %v546
      %v807 = vpop.f32.mrb[0].mxu0
      %v808 = vadd.f32 0.0, %v807
      %v809 = vpop.f32.mrb[0].mxu0
      %v810 = vadd.f32 0.0, %v809
      %v811 = vpop.f32.mrb[0].mxu0
      %v812 = vadd.f32 0.0, %v811
      %v813 = vpop.f32.mrb[0].mxu0
      %v814 = vadd.f32 0.0, %v813
      %815 = vmatprep.mubr.bf16.mxu0 0
      %816 = vmatmul.mubr.bf16.gmra.mrb[0].mxu0 %v547
      %v817 = vpop.f32.mrb[0].mxu0
      %v818 = vadd.f32 0.0, %v817
      %v819 = vpop.f32.mrb[0].mxu0
      %v820 = vadd.f32 0.0, %v819
      %v821 = vpop.f32.mrb[0].mxu0
      %v822 = vadd.f32 0.0, %v821
      %v823 = vpop.f32.mrb[0].mxu0
      %v824 = vadd.f32 0.0, %v823
      %825 = vmatprep.mubr.bf16.mxu0 0
      %826 = vmatmul.mubr.bf16.gmra.mrb[0].mxu0 %v548
      %v827 = vpop.f32.mrb[0].mxu0
      %v828 = vadd.f32 0.0, %v827
      %v829 = vpop.f32.mrb[0].mxu0
      %v830 = vadd.f32 0.0, %v829
      %v831 = vpop.f32.mrb[0].mxu0
      %v832 = vadd.f32 0.0, %v831
      %v833 = vpop.f32.mrb[0].mxu0
      %v834 = vadd.f32 0.0, %v833
      %835 = vmatprep.mubr.bf16.mxu0 0
      %836 = vmatmul.mubr.bf16.gmra.mrb[0].mxu0 %v549
      %v837 = vpop.f32.mrb[0].mxu0
      %v838 = vadd.f32 0.0, %v837
      %v839 = vpop.f32.mrb[0].mxu0
      %v840 = vadd.f32 0.0, %v839
      %v841 = vpop.f32.mrb[0].mxu0
      %v842 = vadd.f32 0.0, %v841
      %v843 = vpop.f32.mrb[0].mxu0
      %v844 = vadd.f32 0.0, %v843
      %845 = vmatprep.mubr.bf16.mxu0 0
      %846 = vmatmul.mubr.bf16.gmra.mrb[0].mxu0 %v550
      %v847 = vpop.f32.mrb[0].mxu0
      %v848 = vadd.f32 0.0, %v847
      %v849 = vpop.f32.mrb[0].mxu0
      %v850 = vadd.f32 0.0, %v849
      %v851 = vpop.f32.mrb[0].mxu0
      %v852 = vadd.f32 0.0, %v851
      %v853 = vpop.f32.mrb[0].mxu0
      %v854 = vadd.f32 0.0, %v853
      %855 = vdwg.mxu0
      %856 = vmatprep.subr.bf16.mxu0 %v682
      %857 = vmatpush1.bf16.msra.mxu0 %v681
      %858 = vmatprep.subr.bf16.mxu0 %v686
      %859 = vmatpush1.bf16.msra.mxu0 %v685
      %860 = vmatprep.subr.bf16.mxu0 %v690
      %861 = vmatpush1.bf16.msra.mxu0 %v689
      %862 = vmatprep.subr.bf16.mxu0 %v694
      %863 = vmatpush1.bf16.msra.mxu0 %v693
      %864 = vmatprep.subr.bf16.mxu0 %v698
      %865 = vmatpush1.bf16.msra.mxu0 %v697
      %866 = vmatprep.subr.bf16.mxu0 %v702
      %867 = vmatpush1.bf16.msra.mxu0 %v701
      %868 = vmatprep.subr.bf16.mxu0 %v706
      %869 = vmatpush1.bf16.msra.mxu0 %v705
      %870 = vmatprep.subr.bf16.mxu0 %v710
      %871 = vmatpush1.bf16.msra.mxu0 %v709
      %872 = vmatprep.subr.bf16.mxu0 0
      %873 = vmatpush1.bf16.msra.mxu0 0
      %874 = vmatprep.subr.bf16.mxu0 0
      %875 = vmatpush1.bf16.msra.mxu0 0
      %876 = vmatprep.subr.bf16.mxu0 0
      %877 = vmatpush1.bf16.msra.mxu0 0
      %878 = vmatprep.subr.bf16.mxu0 0
      %879 = vmatpush1.bf16.msra.mxu0 0
      %880 = vmatprep.subr.bf16.mxu0 0
      %881 = vmatpush1.bf16.msra.mxu0 0
      %882 = vmatprep.subr.bf16.mxu0 0
      %883 = vmatpush1.bf16.msra.mxu0 0
      %884 = vmatprep.subr.bf16.mxu0 0
      %885 = vmatpush1.bf16.msra.mxu0 0
      %886 = vmatprep.subr.bf16.mxu0 0
      %887 = vmatpush1.bf16.msra.mxu0 0
      %888 = vmatprep.mubr.bf16.mxu0 0
      %889 = vmatmul.mubr.bf16.gmra.mrb[0].mxu0 %v543
      %v890 = vpop.f32.mrb[0].mxu0
      %v891 = vadd.f32 0.0, %v890
      %v892 = vpop.f32.mrb[0].mxu0
      %v893 = vadd.f32 0.0, %v892
      %v894 = vpop.f32.mrb[0].mxu0
      %v895 = vadd.f32 0.0, %v894
      %v896 = vpop.f32.mrb[0].mxu0
      %v897 = vadd.f32 0.0, %v896
      %898 = vmatprep.mubr.bf16.mxu0 0
      %899 = vmatmul.mubr.bf16.gmra.mrb[0].mxu0 %v544
      %v900 = vpop.f32.mrb[0].mxu0
      %v901 = vadd.f32 0.0, %v900
      %v902 = vpop.f32.mrb[0].mxu0
      %v903 = vadd.f32 0.0, %v902
      %v904 = vpop.f32.mrb[0].mxu0
      %v905 = vadd.f32 0.0, %v904
      %v906 = vpop.f32.mrb[0].mxu0
      %v907 = vadd.f32 0.0, %v906
      %908 = vmatprep.mubr.bf16.mxu0 0
      %909 = vmatmul.mubr.bf16.gmra.mrb[0].mxu0 %v545
      %v910 = vpop.f32.mrb[0].mxu0
      %v911 = vadd.f32 0.0, %v910
      %v912 = vpop.f32.mrb[0].mxu0
      %v913 = vadd.f32 0.0, %v912
      %v914 = vpop.f32.mrb[0].mxu0
      %v915 = vadd.f32 0.0, %v914
      %v916 = vpop.f32.mrb[0].mxu0
      %v917 = vadd.f32 0.0, %v916
      %918 = vmatprep.mubr.bf16.mxu0 0
      %919 = vmatmul.mubr.bf16.gmra.mrb[0].mxu0 %v546
      %v920 = vpop.f32.mrb[0].mxu0
      %v921 = vadd.f32 0.0, %v920
      %v922 = vpop.f32.mrb[0].mxu0
      %v923 = vadd.f32 0.0, %v922
      %v924 = vpop.f32.mrb[0].mxu0
      %v925 = vadd.f32 0.0, %v924
      %v926 = vpop.f32.mrb[0].mxu0
      %v927 = vadd.f32 0.0, %v926
      %928 = vmatprep.mubr.bf16.mxu0 0
      %929 = vmatmul.mubr.bf16.gmra.mrb[0].mxu0 %v547
      %v930 = vpop.f32.mrb[0].mxu0
      %v931 = vadd.f32 0.0, %v930
      %v932 = vpop.f32.mrb[0].mxu0
      %v933 = vadd.f32 0.0, %v932
      %v934 = vpop.f32.mrb[0].mxu0
      %v935 = vadd.f32 0.0, %v934
      %v936 = vpop.f32.mrb[0].mxu0
      %v937 = vadd.f32 0.0, %v936
      %938 = vmatprep.mubr.bf16.mxu0 0
      %939 = vmatmul.mubr.bf16.gmra.mrb[0].mxu0 %v548
      %v940 = vpop.f32.mrb[0].mxu0
      %v941 = vadd.f32 0.0, %v940
      %v942 = vpop.f32.mrb[0].mxu0
      %v943 = vadd.f32 0.0, %v942
      %v944 = vpop.f32.mrb[0].mxu0
      %v945 = vadd.f32 0.0, %v944
      %v946 = vpop.f32.mrb[0].mxu0
      %v947 = vadd.f32 0.0, %v946
      %948 = vmatprep.mubr.bf16.mxu0 0
      %949 = vmatmul.mubr.bf16.gmra.mrb[0].mxu0 %v549
      %v950 = vpop.f32.mrb[0].mxu0
      %v951 = vadd.f32 0.0, %v950
      %v952 = vpop.f32.mrb[0].mxu0
      %v953 = vadd.f32 0.0, %v952
      %v954 = vpop.f32.mrb[0].mxu0
      %v955 = vadd.f32 0.0, %v954
      %v956 = vpop.f32.mrb[0].mxu0
      %v957 = vadd.f32 0.0, %v956
      %958 = vmatprep.mubr.bf16.mxu0 0
      %959 = vmatmul.mubr.bf16.gmra.mrb[0].mxu0 %v550
      %v960 = vpop.f32.mrb[0].mxu0
      %v961 = vadd.f32 0.0, %v960
      %v962 = vpop.f32.mrb[0].mxu0
      %v963 = vadd.f32 0.0, %v962
      %v964 = vpop.f32.mrb[0].mxu0
      %v965 = vadd.f32 0.0, %v964
      %v966 = vpop.f32.mrb[0].mxu0
      %v967 = vadd.f32 0.0, %v966
      %968 = vdwg.mxu0
      %969 = vst [vmem:[%s219] sm:$0xff] %v778
      %970 = vst [vmem:[%s219 + $0x8] sm:$0xff] %v780
      %971 = vst [vmem:[%s219 + $0x10] sm:$0xff] %v891
      %vm972 = vcmask 785408
      %973 = vst.msk [vmem:[%s219 + $0x18] sm:$0xff] %vm972, %v893
      %974 = vst [vmem:[%s219 + $0x20] sm:$0xff] %v782
      %975 = vst [vmem:[%s219 + $0x28] sm:$0xff] %v784
      %976 = vst [vmem:[%s219 + $0x30] sm:$0xff] %v895
      %977 = vst.msk [vmem:[%s219 + $0x38] sm:$0xff] %vm972, %v897
      %978 = vst [vmem:[%s219 + $0x40] sm:$0xff] %v788
      %979 = vst [vmem:[%s219 + $0x48] sm:$0xff] %v790
      %980 = vst [vmem:[%s219 + $0x50] sm:$0xff] %v901
      %981 = vst.msk [vmem:[%s219 + $0x58] sm:$0xff] %vm972, %v903
      %982 = vst [vmem:[%s219 + $0x60] sm:$0xff] %v792
      %983 = vst [vmem:[%s219 + $0x68] sm:$0xff] %v794
      %984 = vst [vmem:[%s219 + $0x70] sm:$0xff] %v905
      %985 = vst.msk [vmem:[%s219 + $0x78] sm:$0xff] %vm972, %v907
      %986 = vst [vmem:[%s219 + $0x80] sm:$0xff] %v798
      %987 = vst [vmem:[%s219 + $0x88] sm:$0xff] %v800
      %988 = vst [vmem:[%s219 + $0x90] sm:$0xff] %v911
      %989 = vst.msk [vmem:[%s219 + $0x98] sm:$0xff] %vm972, %v913
      %990 = vst [vmem:[%s219 + $0xa0] sm:$0xff] %v802
      %991 = vst [vmem:[%s219 + $0xa8] sm:$0xff] %v804
      %992 = vst [vmem:[%s219 + $0xb0] sm:$0xff] %v915
      %993 = vst.msk [vmem:[%s219 + $0xb8] sm:$0xff] %vm972, %v917
      %994 = vst [vmem:[%s219 + $0xc0] sm:$0xff] %v808
      %995 = vst [vmem:[%s219 + $0xc8] sm:$0xff] %v810
      %996 = vst [vmem:[%s219 + $0xd0] sm:$0xff] %v921
      %997 = vst.msk [vmem:[%s219 + $0xd8] sm:$0xff] %vm972, %v923
      %998 = vst [vmem:[%s219 + $0xe0] sm:$0xff] %v812
      %999 = vst [vmem:[%s219 + $0xe8] sm:$0xff] %v814
      %1000 = vst [vmem:[%s219 + $0xf0] sm:$0xff] %v925
      %1001 = vst.msk [vmem:[%s219 + $0xf8] sm:$0xff] %vm972, %v927
      %1002 = vst [vmem:[%s219 + $0x100] sm:$0xff] %v818
      %1003 = vst [vmem:[%s219 + $0x108] sm:$0xff] %v820
      %1004 = vst [vmem:[%s219 + $0x110] sm:$0xff] %v931
      %1005 = vst.msk [vmem:[%s219 + $0x118] sm:$0xff] %vm972, %v933
      %1006 = vst [vmem:[%s219 + $0x120] sm:$0xff] %v822
      %1007 = vst [vmem:[%s219 + $0x128] sm:$0xff] %v824
      %1008 = vst [vmem:[%s219 + $0x130] sm:$0xff] %v935
      %1009 = vst.msk [vmem:[%s219 + $0x138] sm:$0xff] %vm972, %v937
      %1010 = vst [vmem:[%s219 + $0x140] sm:$0xff] %v828
      %1011 = vst [vmem:[%s219 + $0x148] sm:$0xff] %v830
      %1012 = vst [vmem:[%s219 + $0x150] sm:$0xff] %v941
      %1013 = vst.msk [vmem:[%s219 + $0x158] sm:$0xff] %vm972, %v943
      %1014 = vst [vmem:[%s219 + $0x160] sm:$0xff] %v832
      %1015 = vst [vmem:[%s219 + $0x168] sm:$0xff] %v834
      %1016 = vst [vmem:[%s219 + $0x170] sm:$0xff] %v945
      %1017 = vst.msk [vmem:[%s219 + $0x178] sm:$0xff] %vm972, %v947
      %1018 = vst [vmem:[%s219 + $0x180] sm:$0xff] %v838
      %1019 = vst [vmem:[%s219 + $0x188] sm:$0xff] %v840
      %1020 = vst [vmem:[%s219 + $0x190] sm:$0xff] %v951
      %1021 = vst.msk [vmem:[%s219 + $0x198] sm:$0xff] %vm972, %v953
      %1022 = vst [vmem:[%s219 + $0x1a0] sm:$0xff] %v842
      %1023 = vst [vmem:[%s219 + $0x1a8] sm:$0xff] %v844
      %1024 = vst [vmem:[%s219 + $0x1b0] sm:$0xff] %v955
      %1025 = vst.msk [vmem:[%s219 + $0x1b8] sm:$0xff] %vm972, %v957
      %1026 = vst [vmem:[%s219 + $0x1c0] sm:$0xff] %v848
      %1027 = vst [vmem:[%s219 + $0x1c8] sm:$0xff] %v850
      %1028 = vst [vmem:[%s219 + $0x1d0] sm:$0xff] %v961
      %1029 = vst.msk [vmem:[%s219 + $0x1d8] sm:$0xff] %vm972, %v963
      %1030 = vst [vmem:[%s219 + $0x1e0] sm:$0xff] %v852
      %1031 = vst [vmem:[%s219 + $0x1e8] sm:$0xff] %v854
      %1032 = vst [vmem:[%s219 + $0x1f0] sm:$0xff] %v965
      %1033 = vst.msk [vmem:[%s219 + $0x1f8] sm:$0xff] %vm972, %v967
      %s1034 = smul.u32 16, %s19
      %p1035 = scmp.lt.s32.totalorder %s18, 1
      %s1036 = scalar_select %p1035, %s18, 1
      %p1037 = scmp.lt.s32.totalorder %s1034, 63
      %s1038 = scalar_select %p1037, %s1034, 63
      %s1039 = smul.addr %s1038, 4
      %s1040 = smul.addr %s1036, 256
      %s1041 = sadd.s32 %s1039, %s1040
      %s1042 = smul.addr %s1041, 8
      %s1043 = scalar_lea.vmem %s3, %s1042
      // Predicated region
      $region33: #{videogpt_ft_forward.5} parent=31 // pred_check
        %p1044 = pneg %p119
      $region34: #{videogpt_ft_forward.5} parent=31 // pred_check_branch
        %1046 = sbr.rel (%p1044) target = $region36
      $region35: #{videogpt_ft_forward.5} parent=31 // pred_region
        %s1047 = smul.u32 16, %s19
      $region36: #{videogpt_ft_forward.5} parent=31 // pred_fallthru
        _
    $region32: #{videogpt_ft_forward.5} parent=5 // pred_fallthru
      _
    %p1048 = scmp.le.s32.totalorder 2, %s9
    // Predicated region
    $region37: #{videogpt_ft_forward.5} parent=5 // pred_check
      %p1049 = pneg %p1048
    $region38: #{videogpt_ft_forward.5} parent=5 // pred_check_branch
      %1051 = sbr.rel (%p1049) target = $region40
    $region39: #{videogpt_ft_forward.5} parent=5 // pred_region
      %s1052 = ssub.s32 %s9, 2
      // Predicated region
      $region41: #{videogpt_ft_forward.5} parent=39 // pred_check
        %p1053 = pneg %p125
      $region42: #{videogpt_ft_forward.5} parent=39 // pred_check_branch
        %1055 = sbr.rel (%p1053) target = $region44
      $region43: #{videogpt_ft_forward.5} parent=39 // pred_region
        %s1056 = smul.u32 16, %s21
        %p1057 = scmp.lt.s32.totalorder %s20, 1
        %s1058 = scalar_select %p1057, %s20, 1
        %p1059 = scmp.lt.s32.totalorder %s1056, 63
        %s1060 = scalar_select %p1059, %s1056, 63
        %s1061 = smul.addr %s1060, 4
        %s1062 = smul.addr %s1058, 256
        %s1063 = sadd.s32 %s1061, %s1062
        %s1064 = smul.addr %s1063, 8
        %s1065 = scalar_lea.vmem %s3, %s1064
      $region44: #{videogpt_ft_forward.5} parent=39 // pred_fallthru
        _
    $region40: #{videogpt_ft_forward.5} parent=5 // pred_fallthru
      _
  $region6: #{videogpt_ft_forward.5} parent=0 // loop_footer
    %s13 = sadd.s32 1, %s9
  $region7: #{videogpt_ft_forward.5} parent=0 // loop_footer_branch
    %8 = sbr.rel target = $region3
  $region8: #{videogpt_ft_forward.5} parent=0 // loop_exit
    _

</llo_original>
